<compile_context>
chip_gen: v7x
topology: tpu7x:2x2x1
jax: 0.10.0
libtpu: 0.0.40
codegen_flags: <defaults>
</compile_context>

<pallas_src>
import jax
import jax.numpy as jnp
from jax import lax
from jax.experimental import pallas as pl
from jax.experimental.pallas import tpu as pltpu


def _self_attention_kernel(gamma_ref, w_ref, b_ref, x_ref, o_ref):
    # gamma_ref: SMEM (1,)            residual mixing scalar
    # w_ref:     VMEM (2C, C) bf16    stacked [Wk^T Wq ; Wv]
    # b_ref:     VMEM (2C, 1) f32     stacked [Wk^T bq ; bv]
    # x_ref:     VMEM (Bb, C, HW)     Bb images, spatial flattened (lane-dense)
    # o_ref:     VMEM (Bb, C, HW)
    n_img, C, HW = x_ref.shape
    gamma = gamma_ref[0]
    w = w_ref[...]                                    # bf16, loaded once per step
    b = b_ref[...]                                    # f32

    def per_image(i, carry):
        x = x_ref[i].astype(jnp.float32)              # (C, HW)
        x_bf = x.astype(jnp.bfloat16)

        # Stacked projection: qx = (Wk^T Wq) x + Wk^T bq,  v = Wv x + bv.
        # TODO(synk): widen to one (2C,C)@(C,Bb*HW) matmul across the Bb images
        # (needs a (C, B*HW) wrapper layout) to fill the MXU N dimension.
        proj = jnp.dot(w, x_bf, preferred_element_type=jnp.float32) + b   # (2C, HW)
        qx = proj[:C]                                  # (C, HW)
        v = proj[C:]                                   # (C, HW)

        # scoresT[j, i'] = x_j . qx_i' = x_i'^T Wq^T Wk x_j + bq^T Wk x_j
        # (energy terms constant over the key axis j cancel under the softmax).
        # Keys j live on sublanes, queries i' on lanes, so the PV matmul below
        # is the natural MXU orientation and no (HW,HW) transpose is needed.
        scores_t = lax.dot_general(
            x_bf, qx.astype(jnp.bfloat16),
            (((0,), (0,)), ((), ())),
            preferred_element_type=jnp.float32)        # (HW_k, HW_q)

        # Softmax over keys (axis 0) with deferred normalization, all in f32.
        m = jnp.max(scores_t, axis=0, keepdims=True)   # (1, HW_q)
        p = jnp.exp(scores_t - m)                      # (HW_k, HW_q) f32
        l = jnp.sum(p, axis=0, keepdims=True)          # (1, HW_q)

        # out_unnorm[c, i'] = sum_j v[c, j] p[j, i']  -- natural (C,HW)@(HW,HW).
        out_un = jnp.dot(v.astype(jnp.bfloat16), p.astype(jnp.bfloat16),
                         preferred_element_type=jnp.float32)   # (C, HW)

        # gamma and 1/l folded into a single per-column (lane) scale.
        scale = gamma * pl.reciprocal(l, approx=True)  # (1, HW_q)
        o_ref[i] = (out_un * scale + x).astype(o_ref.dtype)
        return carry

    lax.fori_loop(0, n_img, per_image, 0, unroll=True)


def _pick_images_per_step(batch, max_per_step=8):
    """Largest images-per-step that divides batch while keeping grid >= 2."""
    bb = 1
    for cand in (2, 4, 8):
        if cand <= max_per_step and batch % cand == 0 and batch // cand >= 2:
            bb = cand
    return bb


def self_attention(x, wq, bq, wk, bk, wv, bv, gamma):
    """x: (B, C, H, W); wq/wk: (C//8, C); wv: (C, C); biases 1-D; gamma: (1,).
    Returns gamma * attention(x) + x with shape (B, C, H, W)."""
    B, C, H, W = x.shape
    HW = H * W
    assert C % 8 == 0, "in_dim must be a multiple of 8 (module uses in_dim // 8)"

    # Fold the query/key 1x1 convs:  Mq = Wk^T Wq  (C,C),  u = Wk^T bq  (C,).
    # The dropped energy terms are constant over the key axis and cancel under
    # softmax, so this is exact for the module's forward pass.
    hp = lax.Precision.HIGHEST
    mq = jnp.dot(wk.T, wq, precision=hp).astype(jnp.float32)          # (C, C)
    u = jnp.dot(wk.T, bq, precision=hp).astype(jnp.float32)           # (C,)

    w_all = jnp.concatenate([mq, wv.astype(jnp.float32)], axis=0)     # (2C, C)
    w_all = w_all.astype(jnp.bfloat16)                                # MXU operand
    b_all = jnp.concatenate([u, bv.astype(jnp.float32)], axis=0).reshape(2 * C, 1)
    gamma = gamma.reshape(-1).astype(jnp.float32)                     # (1,)

    # Lane-dense layout: trailing dim is H*W.  Do NOT upcast x in the wrapper.
    x_flat = x.reshape(B, C, HW)
    bb = _pick_images_per_step(B)

    # TODO(synk): for large H*W, tile the key axis flash-style (online softmax)
    # so the (HW, HW) scores never have to be fully VMEM-resident; mandatory on
    # v7x (64 MiB physical VMEM) well before it is on v6e, and raise
    # vmem_limit_bytes explicitly when doing so.
    out_flat = pl.pallas_call(
        _self_attention_kernel,
        out_shape=jax.ShapeDtypeStruct((B, C, HW), x.dtype),
        grid=(B // bb,),
        in_specs=[
            pl.BlockSpec(memory_space=pltpu.MemorySpace.SMEM),     # gamma
            pl.BlockSpec((2 * C, C), lambda b: (0, 0)),            # stacked weights (bf16)
            pl.BlockSpec((2 * C, 1), lambda b: (0, 0)),            # stacked biases  (f32)
            pl.BlockSpec((bb, C, HW), lambda b: (b, 0, 0)),        # bb images
        ],
        out_specs=pl.BlockSpec((bb, C, HW), lambda b: (b, 0, 0)),
        compiler_params=pltpu.CompilerParams(
            dimension_semantics=("parallel",)),
    )(gamma, w_all, b_all, x_flat)

    return out_flat.reshape(B, C, H, W)


def _reference(x, wq, bq, wk, bk, wv, bv, gamma):
    B, C, H, W = x.shape
    HW = H * W
    hp = lax.Precision.HIGHEST
    xf = x.reshape(B, C, HW).astype(jnp.float32)
    q = jnp.einsum('oc,bcn->bon', wq, xf, precision=hp) + bq.reshape(1, -1, 1)
    k = jnp.einsum('oc,bcn->bon', wk, xf, precision=hp) + bk.reshape(1, -1, 1)
    v = jnp.einsum('oc,bcn->bon', wv, xf, precision=hp) + bv.reshape(1, -1, 1)
    energy = jnp.einsum('bdi,bdj->bij', q, k, precision=hp)           # (B, HW, HW)
    attn = jax.nn.softmax(energy, axis=-1)
    out = jnp.einsum('bcj,bij->bci', v, attn, precision=hp)           # (B, C, HW)
    return (gamma.reshape(1, 1, 1) * out + xf).reshape(B, C, H, W)


if __name__ == "__main__":
    key = jax.random.PRNGKey(0)
    kx, kwq, kbq, kwk, kbk, kwv, kbv = jax.random.split(key, 7)

    # in_dim must be >= 8 (module uses in_dim // 8 query/key channels).
    # B=4 exercises the multi-image-per-step path (Bb=2, grid=2).
    B, C, H, W = 4, 64, 16, 16          # C8 = 8, H*W = 256 (lane-dense)
    C8 = C // 8

    x = jax.random.normal(kx, (B, C, H, W), dtype=jnp.float32)

    # Conv2d(C, *, kernel_size=1) init: uniform(+-1/sqrt(fan_in)), fan_in = C.
    bound = 1.0 / jnp.sqrt(jnp.float32(C))
    wq = jax.random.uniform(kwq, (C8, C), jnp.float32, -bound, bound)
    bq = jax.random.uniform(kbq, (C8,), jnp.float32, -bound, bound)
    wk = jax.random.uniform(kwk, (C8, C), jnp.float32, -bound, bound)
    bk = jax.random.uniform(kbk, (C8,), jnp.float32, -bound, bound)
    wv = jax.random.uniform(kwv, (C, C), jnp.float32, -bound, bound)
    bv = jax.random.uniform(kbv, (C,), jnp.float32, -bound, bound)
    # PyTorch initializes gamma to 0 (output == x); use a nonzero value so the
    # attention path is actually exercised by the check below.
    gamma = jnp.array([0.5], dtype=jnp.float32)

    out = self_attention(x, wq, bq, wk, bk, wv, bv, gamma)
    out = jax.block_until_ready(out)

    ref = _reference(x, wq, bq, wk, bk, wv, bv, gamma)
    assert out.shape == (B, C, H, W)
    # bf16 MXU operands + approx reciprocal vs an f32 HIGHEST-precision
    # reference -> slightly looser tolerance than a pure-f32 kernel.
    assert jnp.allclose(out, ref, atol=3e-3, rtol=3e-3), "mismatch vs reference"
    print("KERNEL_OK")
</pallas_src>

<mosaic_0001>
module attributes {stable_mosaic.version = 11 : i64} {
  func.func @_self_attention_kernel(%arg0: i32, %arg1: memref<1xf32, #tpu.memory_space<smem>>, %arg2: memref<128x64xbf16, #tpu.memory_space<vmem>>, %arg3: memref<128x1xf32, #tpu.memory_space<vmem>>, %arg4: memref<2x64x256xf32, #tpu.memory_space<vmem>>, %arg5: memref<2x64x256xf32, #tpu.memory_space<vmem>>) attributes {dimension_semantics = [#tpu.dimension_semantics<parallel>], iteration_bounds = array<i64: 2>, scalar_prefetch = 0 : i64, scratch_operands = 0 : i64, tpu.core_type = #tpu.core_type<tc>, window_params = [{transform_indices = @transform_0, window_bounds = array<i64: 1>}, {pipeline_mode = #tpu.pipeline_mode<synchronous>, transform_indices = @transform_1, window_bounds = array<i64: 128, 64>}, {pipeline_mode = #tpu.pipeline_mode<synchronous>, transform_indices = @transform_2, window_bounds = array<i64: 128, 1>}, {transform_indices = @transform_3, window_bounds = array<i64: 2, 64, 256>}, {transform_indices = @transform_4, window_bounds = array<i64: 2, 64, 256>}]} {
    %c0 = arith.constant 0 : index
    %0 = memref.load %arg1[%c0] : memref<1xf32, #tpu.memory_space<smem>>
    %c0_0 = arith.constant 0 : index
    %c0_1 = arith.constant 0 : index
    %1 = vector.load %arg2[%c0_0, %c0_1] : memref<128x64xbf16, #tpu.memory_space<vmem>>, vector<128x64xbf16>
    %c0_2 = arith.constant 0 : index
    %c0_3 = arith.constant 0 : index
    %2 = vector.load %arg3[%c0_2, %c0_3] : memref<128x1xf32, #tpu.memory_space<vmem>>, vector<128x1xf32>
    %c0_i32 = arith.constant 0 : i32
    %3 = arith.index_cast %c0_i32 : i32 to index
    %c0_4 = arith.constant 0 : index
    %c0_5 = arith.constant 0 : index
    %4 = vector.load %arg4[%3, %c0_4, %c0_5] : memref<2x64x256xf32, #tpu.memory_space<vmem>>, vector<1x64x256xf32>
    %5 = vector.shape_cast %4 : vector<1x64x256xf32> to vector<64x256xf32>
    %6 = arith.truncf %5 : vector<64x256xf32> to vector<64x256xbf16>
    %cst = arith.constant dense<0.000000e+00> : vector<128x256xf32>
    %7 = tpu.matmul %1, %6, %cst {dimension_numbers = #tpu.dot_dimension_numbers<[1], [0], [0], [1], [0, 0, 1, 1], [], []>} : vector<128x64xbf16>, vector<64x256xbf16>, vector<128x256xf32> -> vector<128x256xf32>
    %8 = vector.broadcast %2 : vector<128x1xf32> to vector<128x256xf32>
    %9 = arith.addf %7, %8 : vector<128x256xf32>
    %10 = vector.extract_strided_slice %9 {offsets = [0, 0], sizes = [64, 256], strides = [1, 1]} : vector<128x256xf32> to vector<64x256xf32>
    %11 = vector.extract_strided_slice %9 {offsets = [64, 0], sizes = [64, 256], strides = [1, 1]} : vector<128x256xf32> to vector<64x256xf32>
    %12 = arith.truncf %10 : vector<64x256xf32> to vector<64x256xbf16>
    %cst_6 = arith.constant dense<0.000000e+00> : vector<256x256xf32>
    %13 = tpu.matmul %6, %12, %cst_6 {dimension_numbers = #tpu.dot_dimension_numbers<[0], [0], [1], [1], [0, 1, 1, 1], [], []>} : vector<64x256xbf16>, vector<64x256xbf16>, vector<256x256xf32> -> vector<256x256xf32>
    %cst_7 = arith.constant dense<0xFF800000> : vector<256xf32>
    %14 = vector.multi_reduction <maximumf>, %13, %cst_7 [0] : vector<256x256xf32> to vector<256xf32>
    %15 = vector.shape_cast %14 : vector<256xf32> to vector<1x256xf32>
    %16 = vector.broadcast %15 : vector<1x256xf32> to vector<256x256xf32>
    %17 = arith.subf %13, %16 : vector<256x256xf32>
    %18 = math.exp %17 : vector<256x256xf32>
    %cst_8 = arith.constant dense<0.000000e+00> : vector<256xf32>
    %19 = vector.multi_reduction <add>, %18, %cst_8 [0] : vector<256x256xf32> to vector<256xf32>
    %20 = vector.shape_cast %19 : vector<256xf32> to vector<1x256xf32>
    %21 = arith.truncf %11 : vector<64x256xf32> to vector<64x256xbf16>
    %22 = arith.truncf %18 : vector<256x256xf32> to vector<256x256xbf16>
    %cst_9 = arith.constant dense<0.000000e+00> : vector<64x256xf32>
    %23 = tpu.matmul %21, %22, %cst_9 {dimension_numbers = #tpu.dot_dimension_numbers<[1], [0], [0], [1], [0, 0, 1, 1], [], []>} : vector<64x256xbf16>, vector<256x256xbf16>, vector<64x256xf32> -> vector<64x256xf32>
    %24 = tpu.reciprocal %20 {approx = true} : vector<1x256xf32> -> vector<1x256xf32>
    %25 = vector.broadcast %0 : f32 to vector<1x256xf32>
    %26 = arith.mulf %25, %24 : vector<1x256xf32>
    %27 = vector.broadcast %26 : vector<1x256xf32> to vector<64x256xf32>
    %28 = arith.mulf %23, %27 : vector<64x256xf32>
    %29 = arith.addf %28, %5 : vector<64x256xf32>
    %30 = arith.index_cast %c0_i32 : i32 to index
    %c0_10 = arith.constant 0 : index
    %c0_11 = arith.constant 0 : index
    %31 = vector.load %arg5[%30, %c0_10, %c0_11] : memref<2x64x256xf32, #tpu.memory_space<vmem>>, vector<1x64x256xf32>
    %32 = vector.shape_cast %31 : vector<1x64x256xf32> to vector<64x256xf32>
    %33 = vector.shape_cast %29 : vector<64x256xf32> to vector<1x64x256xf32>
    tpu.vector_store %arg5[%30, %c0_10, %c0_11], %33 {strides = array<i32>} : memref<2x64x256xf32, #tpu.memory_space<vmem>>, vector<1x64x256xf32>,
    %c1_i32 = arith.constant 1 : i32
    %34 = arith.index_cast %c1_i32 : i32 to index
    %c0_12 = arith.constant 0 : index
    %c0_13 = arith.constant 0 : index
    %35 = vector.load %arg4[%34, %c0_12, %c0_13] : memref<2x64x256xf32, #tpu.memory_space<vmem>>, vector<1x64x256xf32>
    %36 = vector.shape_cast %35 : vector<1x64x256xf32> to vector<64x256xf32>
    %37 = arith.truncf %36 : vector<64x256xf32> to vector<64x256xbf16>
    %cst_14 = arith.constant dense<0.000000e+00> : vector<128x256xf32>
    %38 = tpu.matmul %1, %37, %cst_14 {dimension_numbers = #tpu.dot_dimension_numbers<[1], [0], [0], [1], [0, 0, 1, 1], [], []>} : vector<128x64xbf16>, vector<64x256xbf16>, vector<128x256xf32> -> vector<128x256xf32>
    %39 = vector.broadcast %2 : vector<128x1xf32> to vector<128x256xf32>
    %40 = arith.addf %38, %39 : vector<128x256xf32>
    %41 = vector.extract_strided_slice %40 {offsets = [0, 0], sizes = [64, 256], strides = [1, 1]} : vector<128x256xf32> to vector<64x256xf32>
    %42 = vector.extract_strided_slice %40 {offsets = [64, 0], sizes = [64, 256], strides = [1, 1]} : vector<128x256xf32> to vector<64x256xf32>
    %43 = arith.truncf %41 : vector<64x256xf32> to vector<64x256xbf16>
    %cst_15 = arith.constant dense<0.000000e+00> : vector<256x256xf32>
    %44 = tpu.matmul %37, %43, %cst_15 {dimension_numbers = #tpu.dot_dimension_numbers<[0], [0], [1], [1], [0, 1, 1, 1], [], []>} : vector<64x256xbf16>, vector<64x256xbf16>, vector<256x256xf32> -> vector<256x256xf32>
    %cst_16 = arith.constant dense<0xFF800000> : vector<256xf32>
    %45 = vector.multi_reduction <maximumf>, %44, %cst_16 [0] : vector<256x256xf32> to vector<256xf32>
    %46 = vector.shape_cast %45 : vector<256xf32> to vector<1x256xf32>
    %47 = vector.broadcast %46 : vector<1x256xf32> to vector<256x256xf32>
    %48 = arith.subf %44, %47 : vector<256x256xf32>
    %49 = math.exp %48 : vector<256x256xf32>
    %cst_17 = arith.constant dense<0.000000e+00> : vector<256xf32>
    %50 = vector.multi_reduction <add>, %49, %cst_17 [0] : vector<256x256xf32> to vector<256xf32>
    %51 = vector.shape_cast %50 : vector<256xf32> to vector<1x256xf32>
    %52 = arith.truncf %42 : vector<64x256xf32> to vector<64x256xbf16>
    %53 = arith.truncf %49 : vector<256x256xf32> to vector<256x256xbf16>
    %cst_18 = arith.constant dense<0.000000e+00> : vector<64x256xf32>
    %54 = tpu.matmul %52, %53, %cst_18 {dimension_numbers = #tpu.dot_dimension_numbers<[1], [0], [0], [1], [0, 0, 1, 1], [], []>} : vector<64x256xbf16>, vector<256x256xbf16>, vector<64x256xf32> -> vector<64x256xf32>
    %55 = tpu.reciprocal %51 {approx = true} : vector<1x256xf32> -> vector<1x256xf32>
    %56 = vector.broadcast %0 : f32 to vector<1x256xf32>
    %57 = arith.mulf %56, %55 : vector<1x256xf32>
    %58 = vector.broadcast %57 : vector<1x256xf32> to vector<64x256xf32>
    %59 = arith.mulf %54, %58 : vector<64x256xf32>
    %60 = arith.addf %59, %36 : vector<64x256xf32>
    %61 = arith.index_cast %c1_i32 : i32 to index
    %c0_19 = arith.constant 0 : index
    %c0_20 = arith.constant 0 : index
    %62 = vector.load %arg5[%61, %c0_19, %c0_20] : memref<2x64x256xf32, #tpu.memory_space<vmem>>, vector<1x64x256xf32>
    %63 = vector.shape_cast %62 : vector<1x64x256xf32> to vector<64x256xf32>
    %64 = vector.shape_cast %60 : vector<64x256xf32> to vector<1x64x256xf32>
    tpu.vector_store %arg5[%61, %c0_19, %c0_20], %64 {strides = array<i32>} : memref<2x64x256xf32, #tpu.memory_space<vmem>>, vector<1x64x256xf32>,
    %c2_i32 = arith.constant 2 : i32
    return
  }
  func.func @transform_0(%arg0: i32) -> i32 {
    %c0_i32 = arith.constant 0 : i32
    %c0_i32_0 = arith.constant 0 : i32
    return %c0_i32 : i32
  }
  func.func @transform_1(%arg0: i32) -> (i32, i32) {
    %c0_i32 = arith.constant 0 : i32
    %c0_i32_0 = arith.constant 0 : i32
    %c0_i32_1 = arith.constant 0 : i32
    return %c0_i32, %c0_i32_0 : i32, i32
  }
  func.func @transform_2(%arg0: i32) -> (i32, i32) {
    %c0_i32 = arith.constant 0 : i32
    %c0_i32_0 = arith.constant 0 : i32
    %c0_i32_1 = arith.constant 0 : i32
    return %c0_i32, %c0_i32_0 : i32, i32
  }
  func.func @transform_3(%arg0: i32) -> (i32, i32, i32) {
    %c0_i32 = arith.constant 0 : i32
    %c0_i32_0 = arith.constant 0 : i32
    %c0_i32_1 = arith.constant 0 : i32
    return %arg0, %c0_i32, %c0_i32_0 : i32, i32, i32
  }
  func.func @transform_4(%arg0: i32) -> (i32, i32, i32) {
    %c0_i32 = arith.constant 0 : i32
    %c0_i32_0 = arith.constant 0 : i32
    %c0_i32_1 = arith.constant 0 : i32
    return %arg0, %c0_i32, %c0_i32_0 : i32, i32, i32
  }
}

</mosaic_0001>

<llo_original>
// kernel: tpu_custom_call.1
$region0: #{tpu_custom_call.1}
  #allocation0 [shape = 'u32[]', space=smem, size = 0x4, offset = 0x4, fixed_abs, tag = 'smem constant byte address 0x4 - core index']
  #allocation1 [shape = 'u32[144,128]{1,0:T(1,128)}', space=vmem, size = 0x12000, scoped, tag = 'internal scratch']
  #allocation2 [shape = 'f32[1]{0:T(128)S(6)}', space=smem, size = 0x200, scoped, tag = 'scoped memory for tpu_custom_call.1']
  %s0 = inlined_call_operand.<no memory space> [shape: f32[1], index: 0, kind: input, shape index: {}]
  %s1 = inlined_call_operand.vmem [shape: bf16[128,64], index: 1, kind: input, shape index: {}]
  %s2 = inlined_call_operand.vmem [shape: f32[128,1], index: 2, kind: input, shape index: {}]
  %s3 = inlined_call_operand.hbm [shape: f32[4,64,256], index: 3, kind: input, shape index: {}]
  %s4 = inlined_call_operand.hbm [shape: f32[4,64,256], index: 4, kind: output, shape index: {}]
  %s5 = sld [smem:[#allocation0]]
  $region53: #{tpu_custom_call.1} parent=0
    _
  %s7 = ssub.s32 1, %s5
  %s8 = scalar_select 0, %s7, %s5
  %9 = sst [smem:[#allocation2]] %s0
  $region1: #{tpu_custom_call.1} parent=0
    #allocation3 [shape = 'u8[262144]{0}', space=vmem, size = 0x40000, scoped, tag = 'input window, operand 3']
    #allocation4 [shape = 's32[2]{0}', space=sflag, size = 0x8, scoped, tag = 'scoped memory for tpu_custom_call.1']
    #allocation5 [shape = 's32[2]{0}', space=sflag, size = 0x8, scoped, tag = 'scoped memory for tpu_custom_call.1']
    #allocation6 [shape = 'u8[262144]{0}', space=vmem, size = 0x40000, scoped, tag = 'output window, operand 0']
    %10 = vsyncpa [#allocation4], 0
    %s11 = scalar_lea.sflag [#allocation4], 1
    %12 = vsyncpa %s11, 0
    %13 = vsyncpa [#allocation5], 0
    %s14 = scalar_lea.sflag [#allocation5], 1
    %15 = vsyncpa %s14, 0
    loop: start=0, step=1, limit=4
    $region2: #{tpu_custom_call.1} parent=1 // loop_pre_header
      _
    $region3: #{tpu_custom_call.1} parent=1 // loop_header
      %s17 = sphi 0, %s21
      %p18 = scmp.ge.s32.totalorder %s17, 4
      %s25 = sphi 0, %s25
      %s27 = sphi 0, %s25
      %s28 = sphi 0, %s27
      %s42 = sphi 0, %s28
      %s46 = sphi 0, %s46
      %s48 = sphi 0, %s46
      %s49 = sphi 0, %s48
      %s63 = sphi 0, %s49
      %s67 = sphi 0, %s67
      %s69 = sphi 0, %s67
      %s70 = sphi 0, %s69
      %s84 = sphi 0, %s70
      %s90 = sphi 0, %s92
      %s93 = sphi 0, %s90
      %s94 = sphi 0, %s93
      %s110 = sphi 0, %s94
      %s116 = sphi 0, %s118
      %s119 = sphi 0, %s116
      %s120 = sphi 0, %s119
      %s136 = sphi 0, %s120
    $region4: #{tpu_custom_call.1} parent=1 // loop_header_branch
      %20 = sbr.rel (%p18) target = $region8
    $region5: #{tpu_custom_call.1} parent=1 // loop_body
      %s22 = ssub.s32 %s17, 1
      %s23 = ssub.s32 %s17, 2
      %s24 = sadd.s32 %s17, 1
      %s26 = sadd.s32 %s25, 1
      %p29 = scmp.eq.s32.totalorder %s17, 1
      %p30 = scmp.ne.s32.totalorder %s25, %s27
      %p31 = scmp.eq.s32.totalorder %s17, 0
      %p32 = por %p30, %p31
      %p33 = scmp.ne.s32.totalorder %s25, %s27
      %p34 = scmp.eq.s32.totalorder %s22, 1
      %p35 = por %p33, %p34
      %p36 = scmp.ne.s32.totalorder %s27, %s28
      %p37 = scmp.eq.s32.totalorder %s22, 0
      %p38 = por %p36, %p37
      %p39 = scmp.ne.s32.totalorder %s27, %s28
      %p40 = scmp.eq.s32.totalorder %s23, 1
      %p41 = por %p39, %p40
      %p43 = scmp.ne.s32.totalorder %s28, %s42
      %p44 = scmp.eq.s32.totalorder %s23, 0
      %p45 = por %p43, %p44
      %s47 = sadd.s32 %s46, 1
      %p50 = scmp.eq.s32.totalorder %s17, 1
      %p51 = scmp.ne.s32.totalorder %s46, %s48
      %p52 = scmp.eq.s32.totalorder %s17, 0
      %p53 = por %p51, %p52
      %p54 = scmp.ne.s32.totalorder %s46, %s48
      %p55 = scmp.eq.s32.totalorder %s22, 1
      %p56 = por %p54, %p55
      %p57 = scmp.ne.s32.totalorder %s48, %s49
      %p58 = scmp.eq.s32.totalorder %s22, 0
      %p59 = por %p57, %p58
      %p60 = scmp.ne.s32.totalorder %s48, %s49
      %p61 = scmp.eq.s32.totalorder %s23, 1
      %p62 = por %p60, %p61
      %p64 = scmp.ne.s32.totalorder %s49, %s63
      %p65 = scmp.eq.s32.totalorder %s23, 0
      %p66 = por %p64, %p65
      %s68 = sadd.s32 %s67, 1
      %p71 = scmp.eq.s32.totalorder %s17, 1
      %p72 = scmp.ne.s32.totalorder %s67, %s69
      %p73 = scmp.eq.s32.totalorder %s17, 0
      %p74 = por %p72, %p73
      %p75 = scmp.ne.s32.totalorder %s67, %s69
      %p76 = scmp.eq.s32.totalorder %s22, 1
      %p77 = por %p75, %p76
      %p78 = scmp.ne.s32.totalorder %s69, %s70
      %p79 = scmp.eq.s32.totalorder %s22, 0
      %p80 = por %p78, %p79
      %p81 = scmp.ne.s32.totalorder %s69, %s70
      %p82 = scmp.eq.s32.totalorder %s23, 1
      %p83 = por %p81, %p82
      %p85 = scmp.ne.s32.totalorder %s70, %s84
      %p86 = scmp.eq.s32.totalorder %s23, 0
      %p87 = por %p85, %p86
      %s88 = ssub.s32 %s17, %s24
      %p89 = scmp.eq.s32.totalorder %s88, 0
      %s91 = sadd.s32 %s90, 1
      %s92 = scalar_select %p89, %s90, %s91
      %p95 = pneg %p89
      %p96 = scmp.eq.s32.totalorder %s17, 1
      %p97 = por %p95, %p96
      %p98 = scmp.ne.s32.totalorder %s90, %s93
      %p99 = scmp.eq.s32.totalorder %s17, 0
      %p100 = por %p98, %p99
      %p101 = scmp.ne.s32.totalorder %s90, %s93
      %p102 = scmp.eq.s32.totalorder %s22, 1
      %p103 = por %p101, %p102
      %p104 = scmp.ne.s32.totalorder %s93, %s94
      %p105 = scmp.eq.s32.totalorder %s22, 0
      %p106 = por %p104, %p105
      %p107 = scmp.ne.s32.totalorder %s93, %s94
      %p108 = scmp.eq.s32.totalorder %s23, 1
      %p109 = por %p107, %p108
      %p111 = scmp.ne.s32.totalorder %s94, %s110
      %p112 = scmp.eq.s32.totalorder %s23, 0
      %p113 = por %p111, %p112
      %s114 = ssub.s32 %s17, %s24
      %p115 = scmp.eq.s32.totalorder %s114, 0
      %s117 = sadd.s32 %s116, 1
      %s118 = scalar_select %p115, %s116, %s117
      %p121 = pneg %p115
      %p122 = scmp.eq.s32.totalorder %s17, 1
      %p123 = por %p121, %p122
      %p124 = scmp.ne.s32.totalorder %s116, %s119
      %p125 = scmp.eq.s32.totalorder %s17, 0
      %p126 = por %p124, %p125
      %p127 = scmp.ne.s32.totalorder %s116, %s119
      %p128 = scmp.eq.s32.totalorder %s22, 1
      %p129 = por %p127, %p128
      %p130 = scmp.ne.s32.totalorder %s119, %s120
      %p131 = scmp.eq.s32.totalorder %s22, 0
      %p132 = por %p130, %p131
      %p133 = scmp.ne.s32.totalorder %s119, %s120
      %p134 = scmp.eq.s32.totalorder %s23, 1
      %p135 = por %p133, %p134
      %p137 = scmp.ne.s32.totalorder %s120, %s136
      %p138 = scmp.eq.s32.totalorder %s23, 0
      %p139 = por %p137, %p138
      %p140 = scmp.le.s32.totalorder 1, %s17
      %p141 = scmp.lt.s32.totalorder %s17, 3
      %p142 = pnand %p140, %p141
      %p143 = pneg %p142
      // Predicated region
      $region9: #{tpu_custom_call.1} parent=5 // pred_check
        _
      $region10: #{tpu_custom_call.1} parent=5 // pred_check_branch
        %145 = sbr.rel (%p142) target = $region12
      $region11: #{tpu_custom_call.1} parent=5 // pred_region
        %s146 = ssub.s32 %s17, 1
        // Predicated region
        $region13: #{tpu_custom_call.1} parent=11 // pred_check
          %p147 = pneg %p38
        $region14: #{tpu_custom_call.1} parent=11 // pred_check_branch
          %149 = sbr.rel (%p147) target = $region16
        $region15: #{tpu_custom_call.1} parent=11 // pred_region
          _
        $region16: #{tpu_custom_call.1} parent=11 // pred_fallthru
          _
        // Predicated region
        $region17: #{tpu_custom_call.1} parent=11 // pred_check
          %p150 = pneg %p59
        $region18: #{tpu_custom_call.1} parent=11 // pred_check_branch
          %152 = sbr.rel (%p150) target = $region20
        $region19: #{tpu_custom_call.1} parent=11 // pred_region
          _
        $region20: #{tpu_custom_call.1} parent=11 // pred_fallthru
          _
        // Predicated region
        $region21: #{tpu_custom_call.1} parent=11 // pred_check
          %p153 = pneg %p80
        $region22: #{tpu_custom_call.1} parent=11 // pred_check_branch
          %155 = sbr.rel (%p153) target = $region24
        $region23: #{tpu_custom_call.1} parent=11 // pred_region
          _
        $region24: #{tpu_custom_call.1} parent=11 // pred_fallthru
          _
      $region12: #{tpu_custom_call.1} parent=5 // pred_fallthru
        _
      %p156 = scmp.lt.s32.totalorder %s17, 2
      // Predicated region
      $region25: #{tpu_custom_call.1} parent=5 // pred_check
        %p157 = pneg %p156
      $region26: #{tpu_custom_call.1} parent=5 // pred_check_branch
        %159 = sbr.rel (%p157) target = $region28
      $region27: #{tpu_custom_call.1} parent=5 // pred_region
        // Predicated region
        $region29: #{tpu_custom_call.1} parent=27 // pred_check
          %p160 = pneg %p100
        $region30: #{tpu_custom_call.1} parent=27 // pred_check_branch
          %162 = sbr.rel (%p160) target = $region32
        $region31: #{tpu_custom_call.1} parent=27 // pred_region
          %s163 = sand.u32 %s90, 1
          %s164 = scalar_lea.sflag [#allocation4], %s163
          %s165 = sand.u32 %s90, 1
          %s166 = smul.addr %s165, 256
          %s167 = scalar_lea.vmem [#allocation3], %s166
          %s168 = smul.u32 2, %s17
          %s170 = ssub.s32 4096, 4096
          %171 = vsyncadd %s164, %s170
          %s172 = smul.addr %s168, 16
          %s173 = smul.addr %s172, 128
          %s174 = scalar_lea.hbm %s3, %s173
          %s175 = sshll.u32 %s167, 4
          %s176 = int_to_ptr.vmem [resolvable:$true] %s175
          %181 = dma.hbm_to_vmem [thread:$0]  %s174, 4096, %s176, %s164, 256, 256, 16
        $region32: #{tpu_custom_call.1} parent=27 // pred_fallthru
          _
      $region28: #{tpu_custom_call.1} parent=5 // pred_fallthru
        _
      %p182 = scmp.le.s32.totalorder 1, %s17
      %p183 = scmp.lt.s32.totalorder %s17, 3
      %p184 = pnand %p182, %p183
      %p185 = pneg %p184
      // Predicated region
      $region33: #{tpu_custom_call.1} parent=5 // pred_check
        _
      $region34: #{tpu_custom_call.1} parent=5 // pred_check_branch
        %187 = sbr.rel (%p184) target = $region36
      $region35: #{tpu_custom_call.1} parent=5 // pred_region
        %s188 = ssub.s32 %s17, 1
        %s189 = sand.u32 %s93, 1
        %s190 = scalar_lea.sflag [#allocation4], %s189
        %s191 = sand.u32 %s93, 1
        %s192 = smul.addr %s191, 256
        %s193 = scalar_lea.vmem [#allocation3], %s192
        // Predicated region
        $region37: #{tpu_custom_call.1} parent=35 // pred_check
          %p194 = pneg %p106
        $region38: #{tpu_custom_call.1} parent=35 // pred_check_branch
          %196 = sbr.rel (%p194) target = $region40
        $region39: #{tpu_custom_call.1} parent=35 // pred_region
          %197 = dma.done %s190, 4096
        $region40: #{tpu_custom_call.1} parent=35 // pred_fallthru
          _
        %p198 = pneg %p38
        %p199 = pneg %p35
        %p200 = pneg %p59
        %p201 = pneg %p56
        %p202 = pneg %p80
        %p203 = pneg %p77
        %s204 = sand.u32 %s93, 1
        %s205 = scalar_lea.sflag [#allocation4], %s204
        %s206 = sand.u32 %s93, 1
        %s207 = smul.addr %s206, 256
        %s208 = scalar_lea.vmem [#allocation3], %s207
        %p209 = pneg %p106
        %p210 = pneg %p103
        %p211 = pneg %p132
        %p212 = pneg %p129
        %s213 = sand.u32 %s119, 1
        %s214 = scalar_lea.sflag [#allocation5], %s213
        %s215 = sand.u32 %s119, 1
        %s216 = smul.addr %s215, 256
        %s217 = scalar_lea.vmem [#allocation6], %s216
        %s218 = smul.u32 2, %s22
        %s219 = smul.u32 2, %s22
        %s221 = sld [smem:[#allocation2]]
        %v222 = vld [vmem:[%s1] sm:$0xf]
        %v223 = vld [vmem:[%s1 + $0x4] sm:$0xf]
        %v224 = vld [vmem:[%s1 + $0x8] sm:$0xf]
        %v225 = vld [vmem:[%s1 + $0xc] sm:$0xf]
        %v226 = vld [vmem:[%s1 + $0x10] sm:$0xf]
        %v227 = vld [vmem:[%s1 + $0x14] sm:$0xf]
        %v228 = vld [vmem:[%s1 + $0x18] sm:$0xf]
        %v229 = vld [vmem:[%s1 + $0x1c] sm:$0xf]
        %v230 = vld [vmem:[%s1 + $0x20] sm:$0xf]
        %v231 = vld [vmem:[%s1 + $0x24] sm:$0xf]
        %v232 = vld [vmem:[%s1 + $0x28] sm:$0xf]
        %v233 = vld [vmem:[%s1 + $0x2c] sm:$0xf]
        %v234 = vld [vmem:[%s1 + $0x30] sm:$0xf]
        %v235 = vld [vmem:[%s1 + $0x34] sm:$0xf]
        %v236 = vld [vmem:[%s1 + $0x38] sm:$0xf]
        %v237 = vld [vmem:[%s1 + $0x3c] sm:$0xf]
        %v238 = vld [vmem:[%s2] sm:$0xff]
        %v239 = vld [vmem:[%s2 + $0x8] sm:$0xff]
        %v240 = vld [vmem:[%s2 + $0x10] sm:$0xff]
        %v241 = vld [vmem:[%s2 + $0x18] sm:$0xff]
        %v242 = vld [vmem:[%s2 + $0x20] sm:$0xff]
        %v243 = vld [vmem:[%s2 + $0x28] sm:$0xff]
        %v244 = vld [vmem:[%s2 + $0x30] sm:$0xff]
        %v245 = vld [vmem:[%s2 + $0x38] sm:$0xff]
        %v246 = vld [vmem:[%s2 + $0x40] sm:$0xff]
        %v247 = vld [vmem:[%s2 + $0x48] sm:$0xff]
        %v248 = vld [vmem:[%s2 + $0x50] sm:$0xff]
        %v249 = vld [vmem:[%s2 + $0x58] sm:$0xff]
        %v250 = vld [vmem:[%s2 + $0x60] sm:$0xff]
        %v251 = vld [vmem:[%s2 + $0x68] sm:$0xff]
        %v252 = vld [vmem:[%s2 + $0x70] sm:$0xff]
        %v253 = vld [vmem:[%s2 + $0x78] sm:$0xff]
        %v254 = vld [vmem:[%s193] sm:$0xff]
        %v255 = vld [vmem:[%s193 + $0x8] sm:$0xff]
        %v256 = vld [vmem:[%s193 + $0x10] sm:$0xff]
        %v257 = vld [vmem:[%s193 + $0x18] sm:$0xff]
        %v258 = vld [vmem:[%s193 + $0x20] sm:$0xff]
        %v259 = vld [vmem:[%s193 + $0x28] sm:$0xff]
        %v260 = vld [vmem:[%s193 + $0x30] sm:$0xff]
        %v261 = vld [vmem:[%s193 + $0x38] sm:$0xff]
        %v262 = vld [vmem:[%s193 + $0x40] sm:$0xff]
        %v263 = vld [vmem:[%s193 + $0x48] sm:$0xff]
        %v264 = vld [vmem:[%s193 + $0x50] sm:$0xff]
        %v265 = vld [vmem:[%s193 + $0x58] sm:$0xff]
        %v266 = vld [vmem:[%s193 + $0x60] sm:$0xff]
        %v267 = vld [vmem:[%s193 + $0x68] sm:$0xff]
        %v268 = vld [vmem:[%s193 + $0x70] sm:$0xff]
        %v269 = vld [vmem:[%s193 + $0x78] sm:$0xff]
        %v270 = vpack.c.bf16 %v256, %v254
        %v271 = vpack.c.bf16 %v257, %v255
        %v272 = vpack.c.bf16 %v260, %v258
        %v273 = vpack.c.bf16 %v261, %v259
        %v274 = vpack.c.bf16 %v264, %v262
        %v275 = vpack.c.bf16 %v265, %v263
        %v276 = vpack.c.bf16 %v268, %v266
        %v277 = vpack.c.bf16 %v269, %v267
        %279 = vset.pattern.permute.xlu0 0
        %280 = vperm.xlu0 %279, %v238
        %v281 = vpop.permute.xlu0 %280
        %284 = vset.pattern.permute.xlu0 0
        %285 = vperm.xlu0 %284, %v239
        %v286 = vpop.permute.xlu0 %285
        %289 = vset.pattern.permute.xlu0 0
        %290 = vperm.xlu0 %289, %v240
        %v291 = vpop.permute.xlu0 %290
        %294 = vset.pattern.permute.xlu0 0
        %295 = vperm.xlu0 %294, %v241
        %v296 = vpop.permute.xlu0 %295
        %299 = vset.pattern.permute.xlu0 0
        %300 = vperm.xlu0 %299, %v242
        %v301 = vpop.permute.xlu0 %300
        %304 = vset.pattern.permute.xlu0 0
        %305 = vperm.xlu0 %304, %v243
        %v306 = vpop.permute.xlu0 %305
        %309 = vset.pattern.permute.xlu0 0
        %310 = vperm.xlu0 %309, %v244
        %v311 = vpop.permute.xlu0 %310
        %314 = vset.pattern.permute.xlu0 0
        %315 = vperm.xlu0 %314, %v245
        %v316 = vpop.permute.xlu0 %315
        %319 = vset.pattern.permute.xlu0 0
        %320 = vperm.xlu0 %319, %v246
        %v321 = vpop.permute.xlu0 %320
        %324 = vset.pattern.permute.xlu0 0
        %325 = vperm.xlu0 %324, %v247
        %v326 = vpop.permute.xlu0 %325
        %329 = vset.pattern.permute.xlu0 0
        %330 = vperm.xlu0 %329, %v248
        %v331 = vpop.permute.xlu0 %330
        %334 = vset.pattern.permute.xlu0 0
        %335 = vperm.xlu0 %334, %v249
        %v336 = vpop.permute.xlu0 %335
        %339 = vset.pattern.permute.xlu0 0
        %340 = vperm.xlu0 %339, %v250
        %v341 = vpop.permute.xlu0 %340
        %344 = vset.pattern.permute.xlu0 0
        %345 = vperm.xlu0 %344, %v251
        %v346 = vpop.permute.xlu0 %345
        %349 = vset.pattern.permute.xlu0 0
        %350 = vperm.xlu0 %349, %v252
        %v351 = vpop.permute.xlu0 %350
        %354 = vset.pattern.permute.xlu0 0
        %355 = vperm.xlu0 %354, %v253
        %v356 = vpop.permute.xlu0 %355
        %v374 = vunpack.c.l.b16 %v222
        %v375 = vunpack.c.l.b16 %v223
        %v376 = vunpack.c.l.b16 %v224
        %v377 = vunpack.c.l.b16 %v225
        %v378 = vunpack.c.l.b16 %v226
        %v379 = vunpack.c.l.b16 %v227
        %v380 = vunpack.c.l.b16 %v228
        %v381 = vunpack.c.l.b16 %v229
        %v382 = vunpack.c.l.b16 %v230
        %v383 = vunpack.c.l.b16 %v231
        %v384 = vunpack.c.l.b16 %v232
        %v385 = vunpack.c.l.b16 %v233
        %v386 = vunpack.c.l.b16 %v234
        %v387 = vunpack.c.l.b16 %v235
        %v388 = vunpack.c.l.b16 %v236
        %v389 = vunpack.c.l.b16 %v237
        %v390 = vpack.c.b16 %v375, %v374
        %v391 = vpack.c.b16 %v377, %v376
        %v392 = vpack.c.b16 %v379, %v378
        %v393 = vpack.c.b16 %v381, %v380
        %v394 = vpack.c.b16 %v383, %v382
        %v395 = vpack.c.b16 %v385, %v384
        %v396 = vpack.c.b16 %v387, %v386
        %v397 = vpack.c.b16 %v389, %v388
        %vm398 = vcmask 523264
        %v400 = vsel %vm398, %v390, 0
        %v403 = vsel %vm398, %v391, 0
        %v406 = vsel %vm398, %v392, 0
        %v409 = vsel %vm398, %v393, 0
        %v412 = vsel %vm398, %v394, 0
        %v415 = vsel %vm398, %v395, 0
        %v418 = vsel %vm398, %v396, 0
        %v421 = vsel %vm398, %v397, 0
        %423 = vmatprep.subr.bf16.mxu0 %v271
        %424 = vmatpush1.bf16.msra.mxu0 %v270
        %425 = vmatprep.subr.bf16.mxu0 %v273
        %426 = vmatpush1.bf16.msra.mxu0 %v272
        %427 = vmatprep.subr.bf16.mxu0 %v275
        %428 = vmatpush1.bf16.msra.mxu0 %v274
        %429 = vmatprep.subr.bf16.mxu0 %v277
        %430 = vmatpush1.bf16.msra.mxu0 %v276
        %431 = vmatprep.subr.bf16.mxu0 0
        %432 = vmatpush1.bf16.msra.mxu0 0
        %433 = vmatprep.subr.bf16.mxu0 0
        %434 = vmatpush1.bf16.msra.mxu0 0
        %435 = vmatprep.subr.bf16.mxu0 0
        %436 = vmatpush1.bf16.msra.mxu0 0
        %437 = vmatprep.subr.bf16.mxu0 0
        %438 = vmatpush1.bf16.msra.mxu0 0
        %439 = vmatprep.subr.bf16.mxu0 0
        %440 = vmatpush1.bf16.msra.mxu0 0
        %441 = vmatprep.subr.bf16.mxu0 0
        %442 = vmatpush1.bf16.msra.mxu0 0
        %443 = vmatprep.subr.bf16.mxu0 0
        %444 = vmatpush1.bf16.msra.mxu0 0
        %445 = vmatprep.subr.bf16.mxu0 0
        %446 = vmatpush1.bf16.msra.mxu0 0
        %447 = vmatprep.subr.bf16.mxu0 0
        %448 = vmatpush1.bf16.msra.mxu0 0
        %449 = vmatprep.subr.bf16.mxu0 0
        %450 = vmatpush1.bf16.msra.mxu0 0
        %451 = vmatprep.subr.bf16.mxu0 0
        %452 = vmatpush1.bf16.msra.mxu0 0
        %453 = vmatprep.subr.bf16.mxu0 0
        %454 = vmatpush1.bf16.msra.mxu0 0
        %455 = vmatprep.mubr.bf16.mxu0 0
        %456 = vmatmul.mubr.bf16.gmra.mrb[0].mxu0 %v400
        %v457 = vpop.f32.mrb[0].mxu0
        %v458 = vadd.f32 %v281, %v457
        %v459 = vpop.f32.mrb[0].mxu0
        %v460 = vadd.f32 %v281, %v459
        %v461 = vpop.f32.mrb[0].mxu0
        %v462 = vadd.f32 %v286, %v461
        %v463 = vpop.f32.mrb[0].mxu0
        %v464 = vadd.f32 %v286, %v463
        %465 = vmatprep.mubr.bf16.mxu0 0
        %466 = vmatmul.mubr.bf16.gmra.mrb[0].mxu0 %v403
        %v467 = vpop.f32.mrb[0].mxu0
        %v468 = vadd.f32 %v291, %v467
        %v469 = vpop.f32.mrb[0].mxu0
        %v470 = vadd.f32 %v291, %v469
        %v471 = vpop.f32.mrb[0].mxu0
        %v472 = vadd.f32 %v296, %v471
        %v473 = vpop.f32.mrb[0].mxu0
        %v474 = vadd.f32 %v296, %v473
        %475 = vmatprep.mubr.bf16.mxu0 0
        %476 = vmatmul.mubr.bf16.gmra.mrb[0].mxu0 %v406
        %v477 = vpop.f32.mrb[0].mxu0
        %v478 = vadd.f32 %v301, %v477
        %v479 = vpop.f32.mrb[0].mxu0
        %v480 = vadd.f32 %v301, %v479
        %v481 = vpop.f32.mrb[0].mxu0
        %v482 = vadd.f32 %v306, %v481
        %v483 = vpop.f32.mrb[0].mxu0
        %v484 = vadd.f32 %v306, %v483
        %485 = vmatprep.mubr.bf16.mxu0 0
        %486 = vmatmul.mubr.bf16.gmra.mrb[0].mxu0 %v409
        %v487 = vpop.f32.mrb[0].mxu0
        %v488 = vadd.f32 %v311, %v487
        %v489 = vpop.f32.mrb[0].mxu0
        %v490 = vadd.f32 %v311, %v489
        %v491 = vpop.f32.mrb[0].mxu0
        %v492 = vadd.f32 %v316, %v491
        %v493 = vpop.f32.mrb[0].mxu0
        %v494 = vadd.f32 %v316, %v493
        %495 = vmatprep.mubr.bf16.mxu0 0
        %496 = vmatmul.mubr.bf16.gmra.mrb[0].mxu0 %v412
        %v497 = vpop.f32.mrb[0].mxu0
        %v498 = vadd.f32 %v321, %v497
        %v499 = vpop.f32.mrb[0].mxu0
        %v500 = vadd.f32 %v321, %v499
        %v501 = vpop.f32.mrb[0].mxu0
        %v502 = vadd.f32 %v326, %v501
        %v503 = vpop.f32.mrb[0].mxu0
        %v504 = vadd.f32 %v326, %v503
        %505 = vmatprep.mubr.bf16.mxu0 0
        %506 = vmatmul.mubr.bf16.gmra.mrb[0].mxu0 %v415
        %v507 = vpop.f32.mrb[0].mxu0
        %v508 = vadd.f32 %v331, %v507
        %v509 = vpop.f32.mrb[0].mxu0
        %v510 = vadd.f32 %v331, %v509
        %v511 = vpop.f32.mrb[0].mxu0
        %v512 = vadd.f32 %v336, %v511
        %v513 = vpop.f32.mrb[0].mxu0
        %v514 = vadd.f32 %v336, %v513
        %515 = vmatprep.mubr.bf16.mxu0 0
        %516 = vmatmul.mubr.bf16.gmra.mrb[0].mxu0 %v418
        %v517 = vpop.f32.mrb[0].mxu0
        %v518 = vadd.f32 %v341, %v517
        %v519 = vpop.f32.mrb[0].mxu0
        %v520 = vadd.f32 %v341, %v519
        %v521 = vpop.f32.mrb[0].mxu0
        %v522 = vadd.f32 %v346, %v521
        %v523 = vpop.f32.mrb[0].mxu0
        %v524 = vadd.f32 %v346, %v523
        %525 = vmatprep.mubr.bf16.mxu0 0
        %526 = vmatmul.mubr.bf16.gmra.mrb[0].mxu0 %v421
        %v527 = vpop.f32.mrb[0].mxu0
        %v528 = vadd.f32 %v351, %v527
        %v529 = vpop.f32.mrb[0].mxu0
        %v530 = vadd.f32 %v351, %v529
        %v531 = vpop.f32.mrb[0].mxu0
        %v532 = vadd.f32 %v356, %v531
        %v533 = vpop.f32.mrb[0].mxu0
        %v534 = vadd.f32 %v356, %v533
        %535 = vdwg.mxu0
        %v536 = vpack.c.bf16 %v462, %v458
        %v537 = vpack.c.bf16 %v464, %v460
        %v538 = vpack.c.bf16 %v472, %v468
        %v539 = vpack.c.bf16 %v474, %v470
        %v540 = vpack.c.bf16 %v482, %v478
        %v541 = vpack.c.bf16 %v484, %v480
        %v542 = vpack.c.bf16 %v492, %v488
        %v543 = vpack.c.bf16 %v494, %v490
        %544 = vxpose.xlu0.c.b16.start [1/8] %v270, 128
        %545 = vxpose.xlu0.c.b16.cont [2/8] %v272, 128
        %546 = vxpose.xlu0.c.b16.cont [3/8] %v274, 128
        %547 = vxpose.xlu0.c.b16.cont [4/8] %v276, 128
        %548 = vxpose.xlu0.c.b16.cont [5/8] 0, 128
        %549 = vxpose.xlu0.c.b16.cont [6/8] 0, 128
        %550 = vxpose.xlu0.c.b16.cont [7/8] 0, 128
        %551 = vxpose.xlu0.c.b16.end [8/8] 0, 128
        %v552 = vpop.trf.xlu0
        %v553 = vpop.trf.xlu0
        %v554 = vpop.trf.xlu0
        %v555 = vpop.trf.xlu0
        %v556 = vpop.trf.xlu0
        %v557 = vpop.trf.xlu0
        %v558 = vpop.trf.xlu0
        %v559 = vpop.trf.xlu0
        %560 = vxpose.xlu0.c.b16.start [1/8] %v271, 128
        %561 = vxpose.xlu0.c.b16.cont [2/8] %v273, 128
        %562 = vxpose.xlu0.c.b16.cont [3/8] %v275, 128
        %563 = vxpose.xlu0.c.b16.cont [4/8] %v277, 128
        %564 = vxpose.xlu0.c.b16.cont [5/8] 0, 128
        %565 = vxpose.xlu0.c.b16.cont [6/8] 0, 128
        %566 = vxpose.xlu0.c.b16.cont [7/8] 0, 128
        %567 = vxpose.xlu0.c.b16.end [8/8] 0, 128
        %v568 = vpop.trf.xlu0
        %v569 = vpop.trf.xlu0
        %v570 = vpop.trf.xlu0
        %v571 = vpop.trf.xlu0
        %v572 = vpop.trf.xlu0
        %v573 = vpop.trf.xlu0
        %v574 = vpop.trf.xlu0
        %v575 = vpop.trf.xlu0
        %v577 = vsel %vm398, %v552, 0
        %v580 = vsel %vm398, %v553, 0
        %v583 = vsel %vm398, %v554, 0
        %v586 = vsel %vm398, %v555, 0
        %v589 = vsel %vm398, %v556, 0
        %v592 = vsel %vm398, %v557, 0
        %v595 = vsel %vm398, %v558, 0
        %v598 = vsel %vm398, %v559, 0
        %v601 = vsel %vm398, %v568, 0
        %v604 = vsel %vm398, %v569, 0
        %v607 = vsel %vm398, %v570, 0
        %v610 = vsel %vm398, %v571, 0
        %v613 = vsel %vm398, %v572, 0
        %v616 = vsel %vm398, %v573, 0
        %v619 = vsel %vm398, %v574, 0
        %v622 = vsel %vm398, %v575, 0
        %624 = vmatprep.subr.bf16.mxu0 %v537
        %625 = vmatpush1.bf16.msra.mxu0 %v536
        %626 = vmatprep.subr.bf16.mxu0 %v539
        %627 = vmatpush1.bf16.msra.mxu0 %v538
        %628 = vmatprep.subr.bf16.mxu0 %v541
        %629 = vmatpush1.bf16.msra.mxu0 %v540
        %630 = vmatprep.subr.bf16.mxu0 %v543
        %631 = vmatpush1.bf16.msra.mxu0 %v542
        %632 = vmatprep.subr.bf16.mxu0 0
        %633 = vmatpush1.bf16.msra.mxu0 0
        %634 = vmatprep.subr.bf16.mxu0 0
        %635 = vmatpush1.bf16.msra.mxu0 0
        %636 = vmatprep.subr.bf16.mxu0 0
        %637 = vmatpush1.bf16.msra.mxu0 0
        %638 = vmatprep.subr.bf16.mxu0 0
        %639 = vmatpush1.bf16.msra.mxu0 0
        %640 = vmatprep.subr.bf16.mxu0 0
        %641 = vmatpush1.bf16.msra.mxu0 0
        %642 = vmatprep.subr.bf16.mxu0 0
        %643 = vmatpush1.bf16.msra.mxu0 0
        %644 = vmatprep.subr.bf16.mxu0 0
        %645 = vmatpush1.bf16.msra.mxu0 0
        %646 = vmatprep.subr.bf16.mxu0 0
        %647 = vmatpush1.bf16.msra.mxu0 0
        %648 = vmatprep.subr.bf16.mxu0 0
        %649 = vmatpush1.bf16.msra.mxu0 0
        %650 = vmatprep.subr.bf16.mxu0 0
        %651 = vmatpush1.bf16.msra.mxu0 0
        %652 = vmatprep.subr.bf16.mxu0 0
        %653 = vmatpush1.bf16.msra.mxu0 0
        %654 = vmatprep.subr.bf16.mxu0 0
        %655 = vmatpush1.bf16.msra.mxu0 0
        %656 = vmatprep.mubr.bf16.mxu0 0
        %657 = vmatmul.mubr.bf16.gmra.mrb[0].mxu0 %v577
        %v658 = vpop.f32.mrb[0].mxu0
        %v659 = vadd.f32 0.0, %v658
        %v660 = vpop.f32.mrb[0].mxu0
        %v661 = vadd.f32 0.0, %v660
        %v662 = vpop.f32.mrb[0].mxu0
        %v663 = vadd.f32 0.0, %v662
        %v664 = vpop.f32.mrb[0].mxu0
        %v665 = vadd.f32 0.0, %v664
        %666 = vmatprep.mubr.bf16.mxu0 0
        %667 = vmatmul.mubr.bf16.gmra.mrb[0].mxu0 %v580
        %v668 = vpop.f32.mrb[0].mxu0
        %v669 = vadd.f32 0.0, %v668
        %v670 = vpop.f32.mrb[0].mxu0
        %v671 = vadd.f32 0.0, %v670
        %v672 = vpop.f32.mrb[0].mxu0
        %v673 = vadd.f32 0.0, %v672
        %v674 = vpop.f32.mrb[0].mxu0
        %v675 = vadd.f32 0.0, %v674
        %676 = vmatprep.mubr.bf16.mxu0 0
        %677 = vmatmul.mubr.bf16.gmra.mrb[0].mxu0 %v583
        %v678 = vpop.f32.mrb[0].mxu0
        %v679 = vadd.f32 0.0, %v678
        %v680 = vpop.f32.mrb[0].mxu0
        %v681 = vadd.f32 0.0, %v680
        %v682 = vpop.f32.mrb[0].mxu0
        %v683 = vadd.f32 0.0, %v682
        %v684 = vpop.f32.mrb[0].mxu0
        %v685 = vadd.f32 0.0, %v684
        %686 = vmatprep.mubr.bf16.mxu0 0
        %687 = vmatmul.mubr.bf16.gmra.mrb[0].mxu0 %v586
        %v688 = vpop.f32.mrb[0].mxu0
        %v689 = vadd.f32 0.0, %v688
        %v690 = vpop.f32.mrb[0].mxu0
        %v691 = vadd.f32 0.0, %v690
        %v692 = vpop.f32.mrb[0].mxu0
        %v693 = vadd.f32 0.0, %v692
        %v694 = vpop.f32.mrb[0].mxu0
        %v695 = vadd.f32 0.0, %v694
        %696 = vmatprep.mubr.bf16.mxu0 0
        %697 = vmatmul.mubr.bf16.gmra.mrb[0].mxu0 %v589
        %v698 = vpop.f32.mrb[0].mxu0
        %v699 = vadd.f32 0.0, %v698
        %v700 = vpop.f32.mrb[0].mxu0
        %v701 = vadd.f32 0.0, %v700
        %v702 = vpop.f32.mrb[0].mxu0
        %v703 = vadd.f32 0.0, %v702
        %v704 = vpop.f32.mrb[0].mxu0
        %v705 = vadd.f32 0.0, %v704
        %706 = vmatprep.mubr.bf16.mxu0 0
        %707 = vmatmul.mubr.bf16.gmra.mrb[0].mxu0 %v592
        %v708 = vpop.f32.mrb[0].mxu0
        %v709 = vadd.f32 0.0, %v708
        %v710 = vpop.f32.mrb[0].mxu0
        %v711 = vadd.f32 0.0, %v710
        %v712 = vpop.f32.mrb[0].mxu0
        %v713 = vadd.f32 0.0, %v712
        %v714 = vpop.f32.mrb[0].mxu0
        %v715 = vadd.f32 0.0, %v714
        %716 = vmatprep.mubr.bf16.mxu0 0
        %717 = vmatmul.mubr.bf16.gmra.mrb[0].mxu0 %v595
        %v718 = vpop.f32.mrb[0].mxu0
        %v719 = vadd.f32 0.0, %v718
        %v720 = vpop.f32.mrb[0].mxu0
        %v721 = vadd.f32 0.0, %v720
        %v722 = vpop.f32.mrb[0].mxu0
        %v723 = vadd.f32 0.0, %v722
        %v724 = vpop.f32.mrb[0].mxu0
        %v725 = vadd.f32 0.0, %v724
        %726 = vmatprep.mubr.bf16.mxu0 0
        %727 = vmatmul.mubr.bf16.gmra.mrb[0].mxu0 %v598
        %v728 = vpop.f32.mrb[0].mxu0
        %v729 = vadd.f32 0.0, %v728
        %v730 = vpop.f32.mrb[0].mxu0
        %v731 = vadd.f32 0.0, %v730
        %v732 = vpop.f32.mrb[0].mxu0
        %v733 = vadd.f32 0.0, %v732
        %v734 = vpop.f32.mrb[0].mxu0
        %v735 = vadd.f32 0.0, %v734
        %736 = vmatprep.mubr.bf16.mxu0 0
        %737 = vmatmul.mubr.bf16.gmra.mrb[0].mxu0 %v601
        %v738 = vpop.f32.mrb[0].mxu0
        %v739 = vadd.f32 0.0, %v738
        %v740 = vpop.f32.mrb[0].mxu0
        %v741 = vadd.f32 0.0, %v740
        %v742 = vpop.f32.mrb[0].mxu0
        %v743 = vadd.f32 0.0, %v742
        %v744 = vpop.f32.mrb[0].mxu0
        %v745 = vadd.f32 0.0, %v744
        %746 = vmatprep.mubr.bf16.mxu0 0
        %747 = vmatmul.mubr.bf16.gmra.mrb[0].mxu0 %v604
        %v748 = vpop.f32.mrb[0].mxu0
        %v749 = vadd.f32 0.0, %v748
        %v750 = vpop.f32.mrb[0].mxu0
        %v751 = vadd.f32 0.0, %v750
        %v752 = vpop.f32.mrb[0].mxu0
        %v753 = vadd.f32 0.0, %v752
        %v754 = vpop.f32.mrb[0].mxu0
        %v755 = vadd.f32 0.0, %v754
        %756 = vmatprep.mubr.bf16.mxu0 0
        %757 = vmatmul.mubr.bf16.gmra.mrb[0].mxu0 %v607
        %v758 = vpop.f32.mrb[0].mxu0
        %v759 = vadd.f32 0.0, %v758
        %v760 = vpop.f32.mrb[0].mxu0
        %v761 = vadd.f32 0.0, %v760
        %v762 = vpop.f32.mrb[0].mxu0
        %v763 = vadd.f32 0.0, %v762
        %v764 = vpop.f32.mrb[0].mxu0
        %v765 = vadd.f32 0.0, %v764
        %766 = vmatprep.mubr.bf16.mxu0 0
        %767 = vmatmul.mubr.bf16.gmra.mrb[0].mxu0 %v610
        %v768 = vpop.f32.mrb[0].mxu0
        %v769 = vadd.f32 0.0, %v768
        %v770 = vpop.f32.mrb[0].mxu0
        %v771 = vadd.f32 0.0, %v770
        %v772 = vpop.f32.mrb[0].mxu0
        %v773 = vadd.f32 0.0, %v772
        %v774 = vpop.f32.mrb[0].mxu0
        %v775 = vadd.f32 0.0, %v774
        %776 = vmatprep.mubr.bf16.mxu0 0
        %777 = vmatmul.mubr.bf16.gmra.mrb[0].mxu0 %v613
        %v778 = vpop.f32.mrb[0].mxu0
        %v779 = vadd.f32 0.0, %v778
        %v780 = vpop.f32.mrb[0].mxu0
        %v781 = vadd.f32 0.0, %v780
        %v782 = vpop.f32.mrb[0].mxu0
        %v783 = vadd.f32 0.0, %v782
        %v784 = vpop.f32.mrb[0].mxu0
        %v785 = vadd.f32 0.0, %v784
        %786 = vmatprep.mubr.bf16.mxu0 0
        %787 = vmatmul.mubr.bf16.gmra.mrb[0].mxu0 %v616
        %v788 = vpop.f32.mrb[0].mxu0
        %v789 = vadd.f32 0.0, %v788
        %v790 = vpop.f32.mrb[0].mxu0
        %v791 = vadd.f32 0.0, %v790
        %v792 = vpop.f32.mrb[0].mxu0
        %v793 = vadd.f32 0.0, %v792
        %v794 = vpop.f32.mrb[0].mxu0
        %v795 = vadd.f32 0.0, %v794
        %796 = vmatprep.mubr.bf16.mxu0 0
        %797 = vmatmul.mubr.bf16.gmra.mrb[0].mxu0 %v619
        %v798 = vpop.f32.mrb[0].mxu0
        %v799 = vadd.f32 0.0, %v798
        %v800 = vpop.f32.mrb[0].mxu0
        %v801 = vadd.f32 0.0, %v800
        %v802 = vpop.f32.mrb[0].mxu0
        %v803 = vadd.f32 0.0, %v802
        %v804 = vpop.f32.mrb[0].mxu0
        %v805 = vadd.f32 0.0, %v804
        %806 = vmatprep.mubr.bf16.mxu0 0
        %807 = vmatmul.mubr.bf16.gmra.mrb[0].mxu0 %v622
        %v808 = vpop.f32.mrb[0].mxu0
        %v809 = vadd.f32 0.0, %v808
        %v810 = vpop.f32.mrb[0].mxu0
        %v811 = vadd.f32 0.0, %v810
        %v812 = vpop.f32.mrb[0].mxu0
        %v813 = vadd.f32 0.0, %v812
        %v814 = vpop.f32.mrb[0].mxu0
        %v815 = vadd.f32 0.0, %v814
        %816 = vdwg.mxu0
        %v817 = vmax.f32 %v659, %v669
        %v818 = vmax.f32 %v663, %v673
        %v819 = vmax.f32 %v817, %v679
        %v820 = vmax.f32 %v818, %v683
        %v821 = vmax.f32 %v819, %v689
        %v822 = vmax.f32 %v820, %v693
        %v823 = vmax.f32 %v821, %v699
        %v824 = vmax.f32 %v822, %v703
        %v825 = vmax.f32 %v823, %v709
        %v826 = vmax.f32 %v824, %v713
        %v827 = vmax.f32 %v825, %v719
        %v828 = vmax.f32 %v826, %v723
        %v829 = vmax.f32 %v827, %v729
        %v830 = vmax.f32 %v828, %v733
        %v831 = vmax.f32 %v829, %v739
        %v832 = vmax.f32 %v830, %v743
        %v833 = vmax.f32 %v831, %v749
        %v834 = vmax.f32 %v832, %v753
        %v835 = vmax.f32 %v833, %v759
        %v836 = vmax.f32 %v834, %v763
        %v837 = vmax.f32 %v835, %v769
        %v838 = vmax.f32 %v836, %v773
        %v839 = vmax.f32 %v837, %v779
        %v840 = vmax.f32 %v838, %v783
        %v841 = vmax.f32 %v839, %v789
        %v842 = vmax.f32 %v840, %v793
        %v843 = vmax.f32 %v841, %v799
        %v844 = vmax.f32 %v842, %v803
        %v845 = vmax.f32 %v843, %v809
        %v846 = vmax.f32 %v844, %v813
        %v847 = vmax.f32 %v845, %v846
        %v848 = vrot.slane %v847, 4
        %v849 = vmax.f32 %v847, %v848
        %v850 = vrot.slane %v849, 2
        %v851 = vmax.f32 %v849, %v850
        %v852 = vrot.slane %v851, 1
        %v853 = vmax.f32 %v851, %v852
        %v854 = vmax.f32 %v661, %v671
        %v855 = vmax.f32 %v665, %v675
        %v856 = vmax.f32 %v854, %v681
        %v857 = vmax.f32 %v855, %v685
        %v858 = vmax.f32 %v856, %v691
        %v859 = vmax.f32 %v857, %v695
        %v860 = vmax.f32 %v858, %v701
        %v861 = vmax.f32 %v859, %v705
        %v862 = vmax.f32 %v860, %v711
        %v863 = vmax.f32 %v861, %v715
        %v864 = vmax.f32 %v862, %v721
        %v865 = vmax.f32 %v863, %v725
        %v866 = vmax.f32 %v864, %v731
        %v867 = vmax.f32 %v865, %v735
        %v868 = vmax.f32 %v866, %v741
        %v869 = vmax.f32 %v867, %v745
        %v870 = vmax.f32 %v868, %v751
        %v871 = vmax.f32 %v869, %v755
        %v872 = vmax.f32 %v870, %v761
        %v873 = vmax.f32 %v871, %v765
        %v874 = vmax.f32 %v872, %v771
        %v875 = vmax.f32 %v873, %v775
        %v876 = vmax.f32 %v874, %v781
        %v877 = vmax.f32 %v875, %v785
        %v878 = vmax.f32 %v876, %v791
        %v879 = vmax.f32 %v877, %v795
        %v880 = vmax.f32 %v878, %v801
        %v881 = vmax.f32 %v879, %v805
        %v882 = vmax.f32 %v880, %v811
        %v883 = vmax.f32 %v881, %v815
        %v884 = vmax.f32 %v882, %v883
        %v885 = vrot.slane %v884, 4
        %v886 = vmax.f32 %v884, %v885
        %v887 = vrot.slane %v886, 2
        %v888 = vmax.f32 %v886, %v887
        %v889 = vrot.slane %v888, 1
        %v890 = vmax.f32 %v888, %v889
        %v891 = vsub.f32 %v659, %v853
        %v892 = vsub.f32 %v661, %v890
        %v893 = vsub.f32 %v663, %v853
        %v894 = vsub.f32 %v665, %v890
        %v895 = vsub.f32 %v669, %v853
        %v896 = vsub.f32 %v671, %v890
        %v897 = vsub.f32 %v673, %v853
        %v898 = vsub.f32 %v675, %v890
        %v899 = vsub.f32 %v679, %v853
        %v900 = vsub.f32 %v681, %v890
        %v901 = vsub.f32 %v683, %v853
        %v902 = vsub.f32 %v685, %v890
        %v903 = vsub.f32 %v689, %v853
        %v904 = vsub.f32 %v691, %v890
        %v905 = vsub.f32 %v693, %v853
        %v906 = vsub.f32 %v695, %v890
        %v907 = vsub.f32 %v699, %v853
        %v908 = vsub.f32 %v701, %v890
        %v909 = vsub.f32 %v703, %v853
        %v910 = vsub.f32 %v705, %v890
        %v911 = vsub.f32 %v709, %v853
        %v912 = vsub.f32 %v711, %v890
        %v913 = vsub.f32 %v713, %v853
        %v914 = vsub.f32 %v715, %v890
        %v915 = vsub.f32 %v719, %v853
        %v916 = vsub.f32 %v721, %v890
        %v917 = vsub.f32 %v723, %v853
        %v918 = vsub.f32 %v725, %v890
        %v919 = vsub.f32 %v729, %v853
        %v920 = vsub.f32 %v731, %v890
        %v921 = vsub.f32 %v733, %v853
        %v922 = vsub.f32 %v735, %v890
        %v923 = vsub.f32 %v739, %v853
        %v924 = vsub.f32 %v741, %v890
        %v925 = vsub.f32 %v743, %v853
        %v926 = vsub.f32 %v745, %v890
        %v927 = vsub.f32 %v749, %v853
        %v928 = vsub.f32 %v751, %v890
        %v929 = vsub.f32 %v753, %v853
        %v930 = vsub.f32 %v755, %v890
        %v931 = vsub.f32 %v759, %v853
        %v932 = vsub.f32 %v761, %v890
        %v933 = vsub.f32 %v763, %v853
        %v934 = vsub.f32 %v765, %v890
        %v935 = vsub.f32 %v769, %v853
        %v936 = vsub.f32 %v771, %v890
        %v937 = vsub.f32 %v773, %v853
        %v938 = vsub.f32 %v775, %v890
        %v939 = vsub.f32 %v779, %v853
        %v940 = vsub.f32 %v781, %v890
        %v941 = vsub.f32 %v783, %v853
        %v942 = vsub.f32 %v785, %v890
        %v943 = vsub.f32 %v789, %v853
        %v944 = vsub.f32 %v791, %v890
        %v945 = vsub.f32 %v793, %v853
        %v946 = vsub.f32 %v795, %v890
        %v947 = vsub.f32 %v799, %v853
        %v948 = vsub.f32 %v801, %v890
        %v949 = vsub.f32 %v803, %v853
        %v950 = vsub.f32 %v805, %v890
        %v951 = vsub.f32 %v809, %v853
        %v952 = vsub.f32 %v811, %v890
        %v953 = vsub.f32 %v813, %v853
        %v954 = vsub.f32 %v815, %v890
        %v955 = vmul.f32 %v891, 1.442695
        %v956 = vpow.pop %v955
        %v957 = vmul.f32 %v892, 1.442695
        %v958 = vpow.pop %v957
        %v959 = vmul.f32 %v893, 1.442695
        %v960 = vpow.pop %v959
        %v961 = vmul.f32 %v894, 1.442695
        %v962 = vpow.pop %v961
        %v963 = vmul.f32 %v895, 1.442695
        %v964 = vpow.pop %v963
        %v965 = vmul.f32 %v896, 1.442695
        %v966 = vpow.pop %v965
        %v967 = vmul.f32 %v897, 1.442695
        %v968 = vpow.pop %v967
        %v969 = vmul.f32 %v898, 1.442695
        %v970 = vpow.pop %v969
        %v971 = vmul.f32 %v899, 1.442695
        %v972 = vpow.pop %v971
        %v973 = vmul.f32 %v900, 1.442695
        %v974 = vpow.pop %v973
        %v975 = vmul.f32 %v901, 1.442695
        %v976 = vpow.pop %v975
        %v977 = vmul.f32 %v902, 1.442695
        %v978 = vpow.pop %v977
        %v979 = vmul.f32 %v903, 1.442695
        %v980 = vpow.pop %v979
        %v981 = vmul.f32 %v904, 1.442695
        %v982 = vpow.pop %v981
        %v983 = vmul.f32 %v905, 1.442695
        %v984 = vpow.pop %v983
        %v985 = vmul.f32 %v906, 1.442695
        %v986 = vpow.pop %v985
        %v987 = vmul.f32 %v907, 1.442695
        %v988 = vpow.pop %v987
        %v989 = vmul.f32 %v908, 1.442695
        %v990 = vpow.pop %v989
        %v991 = vmul.f32 %v909, 1.442695
        %v992 = vpow.pop %v991
        %v993 = vmul.f32 %v910, 1.442695
        %v994 = vpow.pop %v993
        %v995 = vmul.f32 %v911, 1.442695
        %v996 = vpow.pop %v995
        %v997 = vmul.f32 %v912, 1.442695
        %v998 = vpow.pop %v997
        %v999 = vmul.f32 %v913, 1.442695
        %v1000 = vpow.pop %v999
        %v1001 = vmul.f32 %v914, 1.442695
        %v1002 = vpow.pop %v1001
        %v1003 = vmul.f32 %v915, 1.442695
        %v1004 = vpow.pop %v1003
        %v1005 = vmul.f32 %v916, 1.442695
        %v1006 = vpow.pop %v1005
        %v1007 = vmul.f32 %v917, 1.442695
        %v1008 = vpow.pop %v1007
        %v1009 = vmul.f32 %v918, 1.442695
        %v1010 = vpow.pop %v1009
        %v1011 = vmul.f32 %v919, 1.442695
        %v1012 = vpow.pop %v1011
        %v1013 = vmul.f32 %v920, 1.442695
        %v1014 = vpow.pop %v1013
        %v1015 = vmul.f32 %v921, 1.442695
        %v1016 = vpow.pop %v1015
        %v1017 = vmul.f32 %v922, 1.442695
        %v1018 = vpow.pop %v1017
        %v1019 = vmul.f32 %v923, 1.442695
        %v1020 = vpow.pop %v1019
        %v1021 = vmul.f32 %v924, 1.442695
        %v1022 = vpow.pop %v1021
        %v1023 = vmul.f32 %v925, 1.442695
        %v1024 = vpow.pop %v1023
        %v1025 = vmul.f32 %v926, 1.442695
        %v1026 = vpow.pop %v1025
        %v1027 = vmul.f32 %v927, 1.442695
        %v1028 = vpow.pop %v1027
        %v1029 = vmul.f32 %v928, 1.442695
        %v1030 = vpow.pop %v1029
        %v1031 = vmul.f32 %v929, 1.442695
        %v1032 = vpow.pop %v1031
        %v1033 = vmul.f32 %v930, 1.442695
        %v1034 = vpow.pop %v1033
        %v1035 = vmul.f32 %v931, 1.442695
        %v1036 = vpow.pop %v1035
        %v1037 = vmul.f32 %v932, 1.442695
        %v1038 = vpow.pop %v1037
        %v1039 = vmul.f32 %v933, 1.442695
        %v1040 = vpow.pop %v1039
        %v1041 = vmul.f32 %v934, 1.442695
        %v1042 = vpow.pop %v1041
        %v1043 = vmul.f32 %v935, 1.442695
        %v1044 = vpow.pop %v1043
        %v1045 = vmul.f32 %v936, 1.442695
        %v1046 = vpow.pop %v1045
        %v1047 = vmul.f32 %v937, 1.442695
        %v1048 = vpow.pop %v1047
        %v1049 = vmul.f32 %v938, 1.442695
        %v1050 = vpow.pop %v1049
        %v1051 = vmul.f32 %v939, 1.442695
        %v1052 = vpow.pop %v1051
        %v1053 = vmul.f32 %v940, 1.442695
        %v1054 = vpow.pop %v1053
        %v1055 = vmul.f32 %v941, 1.442695
        %v1056 = vpow.pop %v1055
        %v1057 = vmul.f32 %v942, 1.442695
        %v1058 = vpow.pop %v1057
        %v1059 = vmul.f32 %v943, 1.442695
        %v1060 = vpow.pop %v1059
        %v1061 = vmul.f32 %v944, 1.442695
        %v1062 = vpow.pop %v1061
        %v1063 = vmul.f32 %v945, 1.442695
        %v1064 = vpow.pop %v1063
        %v1065 = vmul.f32 %v946, 1.442695
        %v1066 = vpow.pop %v1065
        %v1067 = vmul.f32 %v947, 1.442695
        %v1068 = vpow.pop %v1067
        %v1069 = vmul.f32 %v948, 1.442695
        %v1070 = vpow.pop %v1069
        %v1071 = vmul.f32 %v949, 1.442695
        %v1072 = vpow.pop %v1071
        %v1073 = vmul.f32 %v950, 1.442695
        %v1074 = vpow.pop %v1073
        %v1075 = vmul.f32 %v951, 1.442695
        %v1076 = vpow.pop %v1075
        %v1077 = vmul.f32 %v952, 1.442695
        %v1078 = vpow.pop %v1077
        %v1079 = vmul.f32 %v953, 1.442695
        %v1080 = vpow.pop %v1079
        %v1081 = vmul.f32 %v954, 1.442695
        %v1082 = vpow.pop %v1081
        %v1083 = vadd.f32 %v956, %v960
        %v1084 = vadd.f32 %v1083, %v964
        %v1085 = vadd.f32 %v1084, %v968
        %v1086 = vadd.f32 %v1085, %v972
        %v1087 = vadd.f32 %v1086, %v976
        %v1088 = vadd.f32 %v1087, %v980
        %v1089 = vadd.f32 %v1088, %v984
        %v1090 = vadd.f32 %v1089, %v988
        %v1091 = vadd.f32 %v1090, %v992
        %v1092 = vadd.f32 %v1091, %v996
        %v1093 = vadd.f32 %v1092, %v1000
        %v1094 = vadd.f32 %v1093, %v1004
        %v1095 = vadd.f32 %v1094, %v1008
        %v1096 = vadd.f32 %v1095, %v1012
        %v1097 = vadd.f32 %v1096, %v1016
        %v1098 = vadd.f32 %v1097, %v1020
        %v1099 = vadd.f32 %v1098, %v1024
        %v1100 = vadd.f32 %v1099, %v1028
        %v1101 = vadd.f32 %v1100, %v1032
        %v1102 = vadd.f32 %v1101, %v1036
        %v1103 = vadd.f32 %v1102, %v1040
        %v1104 = vadd.f32 %v1103, %v1044
        %v1105 = vadd.f32 %v1104, %v1048
        %v1106 = vadd.f32 %v1105, %v1052
        %v1107 = vadd.f32 %v1106, %v1056
        %v1108 = vadd.f32 %v1107, %v1060
        %v1109 = vadd.f32 %v1108, %v1064
        %v1110 = vadd.f32 %v1109, %v1068
        %v1111 = vadd.f32 %v1110, %v1072
        %v1112 = vadd.f32 %v1111, %v1076
        %v1113 = vadd.f32 %v1112, %v1080
        %v1114 = vrot.slane %v1113, 4
        %v1115 = vadd.f32 %v1113, %v1114
        %v1116 = vrot.slane %v1115, 2
        %v1117 = vadd.f32 %v1115, %v1116
        %v1118 = vrot.slane %v1117, 1
        %v1119 = vadd.f32 %v1117, %v1118
        %v1120 = vadd.f32 %v958, %v962
        %v1121 = vadd.f32 %v1120, %v966
        %v1122 = vadd.f32 %v1121, %v970
        %v1123 = vadd.f32 %v1122, %v974
        %v1124 = vadd.f32 %v1123, %v978
        %v1125 = vadd.f32 %v1124, %v982
        %v1126 = vadd.f32 %v1125, %v986
        %v1127 = vadd.f32 %v1126, %v990
        %v1128 = vadd.f32 %v1127, %v994
        %v1129 = vadd.f32 %v1128, %v998
        %v1130 = vadd.f32 %v1129, %v1002
        %v1131 = vadd.f32 %v1130, %v1006
        %v1132 = vadd.f32 %v1131, %v1010
        %v1133 = vadd.f32 %v1132, %v1014
        %v1134 = vadd.f32 %v1133, %v1018
        %v1135 = vadd.f32 %v1134, %v1022
        %v1136 = vadd.f32 %v1135, %v1026
        %v1137 = vadd.f32 %v1136, %v1030
        %v1138 = vadd.f32 %v1137, %v1034
        %v1139 = vadd.f32 %v1138, %v1038
        %v1140 = vadd.f32 %v1139, %v1042
        %v1141 = vadd.f32 %v1140, %v1046
        %v1142 = vadd.f32 %v1141, %v1050
        %v1143 = vadd.f32 %v1142, %v1054
        %v1144 = vadd.f32 %v1143, %v1058
        %v1145 = vadd.f32 %v1144, %v1062
        %v1146 = vadd.f32 %v1145, %v1066
        %v1147 = vadd.f32 %v1146, %v1070
        %v1148 = vadd.f32 %v1147, %v1074
        %v1149 = vadd.f32 %v1148, %v1078
        %v1150 = vadd.f32 %v1149, %v1082
        %v1151 = vrot.slane %v1150, 4
        %v1152 = vadd.f32 %v1150, %v1151
        %v1153 = vrot.slane %v1152, 2
        %v1154 = vadd.f32 %v1152, %v1153
        %v1155 = vrot.slane %v1154, 1
        %v1156 = vadd.f32 %v1154, %v1155
        %v1157 = vpack.c.bf16 %v502, %v498
        %v1158 = vpack.c.bf16 %v504, %v500
        %v1159 = vpack.c.bf16 %v512, %v508
        %v1160 = vpack.c.bf16 %v514, %v510
        %v1161 = vpack.c.bf16 %v522, %v518
        %v1162 = vpack.c.bf16 %v524, %v520
        %v1163 = vpack.c.bf16 %v532, %v528
        %v1164 = vpack.c.bf16 %v534, %v530
        %v1165 = vpack.c.bf16 %v960, %v956
        %v1166 = vpack.c.bf16 %v962, %v958
        %v1167 = vpack.c.bf16 %v968, %v964
        %v1168 = vpack.c.bf16 %v970, %v966
        %v1169 = vpack.c.bf16 %v976, %v972
        %v1170 = vpack.c.bf16 %v978, %v974
        %v1171 = vpack.c.bf16 %v984, %v980
        %v1172 = vpack.c.bf16 %v986, %v982
        %v1173 = vpack.c.bf16 %v992, %v988
        %v1174 = vpack.c.bf16 %v994, %v990
        %v1175 = vpack.c.bf16 %v1000, %v996
        %v1176 = vpack.c.bf16 %v1002, %v998
        %v1177 = vpack.c.bf16 %v1008, %v1004
        %v1178 = vpack.c.bf16 %v1010, %v1006
        %v1179 = vpack.c.bf16 %v1016, %v1012
        %v1180 = vpack.c.bf16 %v1018, %v1014
        %v1181 = vpack.c.bf16 %v1024, %v1020
        %v1182 = vpack.c.bf16 %v1026, %v1022
        %v1183 = vpack.c.bf16 %v1032, %v1028
        %v1184 = vpack.c.bf16 %v1034, %v1030
        %v1185 = vpack.c.bf16 %v1040, %v1036
        %v1186 = vpack.c.bf16 %v1042, %v1038
        %v1187 = vpack.c.bf16 %v1048, %v1044
        %v1188 = vpack.c.bf16 %v1050, %v1046
        %v1189 = vpack.c.bf16 %v1056, %v1052
        %v1190 = vpack.c.bf16 %v1058, %v1054
        %v1191 = vpack.c.bf16 %v1064, %v1060
        %v1192 = vpack.c.bf16 %v1066, %v1062
        %v1193 = vpack.c.bf16 %v1072, %v1068
        %v1194 = vpack.c.bf16 %v1074, %v1070
        %v1195 = vpack.c.bf16 %v1080, %v1076
        %v1196 = vpack.c.bf16 %v1082, %v1078
        %1197 = vmatprep.subr.bf16.mxu0 %v1166
        %1198 = vmatpush1.bf16.msra.mxu0 %v1165
        %1199 = vmatprep.subr.bf16.mxu0 %v1168
        %1200 = vmatpush1.bf16.msra.mxu0 %v1167
        %1201 = vmatprep.subr.bf16.mxu0 %v1170
        %1202 = vmatpush1.bf16.msra.mxu0 %v1169
        %1203 = vmatprep.subr.bf16.mxu0 %v1172
        %1204 = vmatpush1.bf16.msra.mxu0 %v1171
        %1205 = vmatprep.subr.bf16.mxu0 %v1174
        %1206 = vmatpush1.bf16.msra.mxu0 %v1173
        %1207 = vmatprep.subr.bf16.mxu0 %v1176
        %1208 = vmatpush1.bf16.msra.mxu0 %v1175
        %1209 = vmatprep.subr.bf16.mxu0 %v1178
        %1210 = vmatpush1.bf16.msra.mxu0 %v1177
        %1211 = vmatprep.subr.bf16.mxu0 %v1180
        %1212 = vmatpush1.bf16.msra.mxu0 %v1179
        %1213 = vmatprep.subr.bf16.mxu0 %v1182
        %1214 = vmatpush1.bf16.msra.mxu0 %v1181
        %1215 = vmatprep.subr.bf16.mxu0 %v1184
        %1216 = vmatpush1.bf16.msra.mxu0 %v1183
        %1217 = vmatprep.subr.bf16.mxu0 %v1186
        %1218 = vmatpush1.bf16.msra.mxu0 %v1185
        %1219 = vmatprep.subr.bf16.mxu0 %v1188
        %1220 = vmatpush1.bf16.msra.mxu0 %v1187
        %1221 = vmatprep.subr.bf16.mxu0 %v1190
        %1222 = vmatpush1.bf16.msra.mxu0 %v1189
        %1223 = vmatprep.subr.bf16.mxu0 %v1192
        %1224 = vmatpush1.bf16.msra.mxu0 %v1191
        %1225 = vmatprep.subr.bf16.mxu0 %v1194
        %1226 = vmatpush1.bf16.msra.mxu0 %v1193
        %1227 = vmatprep.subr.bf16.mxu0 %v1196
        %1228 = vmatpush1.bf16.msra.mxu0 %v1195
        %1229 = vmatprep.mubr.bf16.mxu0 %v1158
        %1230 = vmatmul.mubr.bf16.gmra.mrb[0].mxu0 %v1157
        %v1231 = vpop.f32.mrb[0].mxu0
        %v1232 = vadd.f32 0.0, %v1231
        %v1233 = vpop.f32.mrb[0].mxu0
        %v1234 = vadd.f32 0.0, %v1233
        %v1235 = vpop.f32.mrb[0].mxu0
        %v1236 = vadd.f32 0.0, %v1235
        %v1237 = vpop.f32.mrb[0].mxu0
        %v1238 = vadd.f32 0.0, %v1237
        %1239 = vmatprep.mubr.bf16.mxu0 %v1160
        %1240 = vmatmul.mubr.bf16.gmra.mrb[0].mxu0 %v1159
        %v1241 = vpop.f32.mrb[0].mxu0
        %v1242 = vadd.f32 0.0, %v1241
        %v1243 = vpop.f32.mrb[0].mxu0
        %v1244 = vadd.f32 0.0, %v1243
        %v1245 = vpop.f32.mrb[0].mxu0
        %v1246 = vadd.f32 0.0, %v1245
        %v1247 = vpop.f32.mrb[0].mxu0
        %v1248 = vadd.f32 0.0, %v1247
        %1249 = vmatprep.mubr.bf16.mxu0 %v1162
        %1250 = vmatmul.mubr.bf16.gmra.mrb[0].mxu0 %v1161
        %v1251 = vpop.f32.mrb[0].mxu0
        %v1252 = vadd.f32 0.0, %v1251
        %v1253 = vpop.f32.mrb[0].mxu0
        %v1254 = vadd.f32 0.0, %v1253
        %v1255 = vpop.f32.mrb[0].mxu0
        %v1256 = vadd.f32 0.0, %v1255
        %v1257 = vpop.f32.mrb[0].mxu0
        %v1258 = vadd.f32 0.0, %v1257
        %1259 = vmatprep.mubr.bf16.mxu0 %v1164
        %1260 = vmatmul.mubr.bf16.gmra.mrb[0].mxu0 %v1163
        %v1261 = vpop.f32.mrb[0].mxu0
        %v1262 = vadd.f32 0.0, %v1261
        %v1263 = vpop.f32.mrb[0].mxu0
        %v1264 = vadd.f32 0.0, %v1263
        %v1265 = vpop.f32.mrb[0].mxu0
        %v1266 = vadd.f32 0.0, %v1265
        %v1267 = vpop.f32.mrb[0].mxu0
        %v1268 = vadd.f32 0.0, %v1267
        %1269 = vdwg.mxu0
        %v1270 = vrcp.pop %v1119
        %v1271 = vrcp.pop %v1156
        %v1272 = vstv %s221
        %v1273 = vmul.f32 %v1272, %v1270
        %v1274 = vmul.f32 %v1272, %v1271
        %v1275 = vmul.f32 %v1232, %v1273
        %v1276 = vmul.f32 %v1234, %v1274
        %v1277 = vmul.f32 %v1236, %v1273
        %v1278 = vmul.f32 %v1238, %v1274
        %v1279 = vmul.f32 %v1242, %v1273
        %v1280 = vmul.f32 %v1244, %v1274
        %v1281 = vmul.f32 %v1246, %v1273
        %v1282 = vmul.f32 %v1248, %v1274
        %v1283 = vmul.f32 %v1252, %v1273
        %v1284 = vmul.f32 %v1254, %v1274
        %v1285 = vmul.f32 %v1256, %v1273
        %v1286 = vmul.f32 %v1258, %v1274
        %v1287 = vmul.f32 %v1262, %v1273
        %v1288 = vmul.f32 %v1264, %v1274
        %v1289 = vmul.f32 %v1266, %v1273
        %v1290 = vmul.f32 %v1268, %v1274
        %v1291 = vadd.f32 %v1275, %v254
        %v1292 = vadd.f32 %v1276, %v255
        %v1293 = vadd.f32 %v1277, %v256
        %v1294 = vadd.f32 %v1278, %v257
        %v1295 = vadd.f32 %v1279, %v258
        %v1296 = vadd.f32 %v1280, %v259
        %v1297 = vadd.f32 %v1281, %v260
        %v1298 = vadd.f32 %v1282, %v261
        %v1299 = vadd.f32 %v1283, %v262
        %v1300 = vadd.f32 %v1284, %v263
        %v1301 = vadd.f32 %v1285, %v264
        %v1302 = vadd.f32 %v1286, %v265
        %v1303 = vadd.f32 %v1287, %v266
        %v1304 = vadd.f32 %v1288, %v267
        %v1305 = vadd.f32 %v1289, %v268
        %v1306 = vadd.f32 %v1290, %v269
        %1307 = vst [vmem:[%s217] sm:$0xff] %v1291
        %1308 = vst [vmem:[%s217 + $0x8] sm:$0xff] %v1292
        %1309 = vst [vmem:[%s217 + $0x10] sm:$0xff] %v1293
        %1310 = vst [vmem:[%s217 + $0x18] sm:$0xff] %v1294
        %1311 = vst [vmem:[%s217 + $0x20] sm:$0xff] %v1295
        %1312 = vst [vmem:[%s217 + $0x28] sm:$0xff] %v1296
        %1313 = vst [vmem:[%s217 + $0x30] sm:$0xff] %v1297
        %1314 = vst [vmem:[%s217 + $0x38] sm:$0xff] %v1298
        %1315 = vst [vmem:[%s217 + $0x40] sm:$0xff] %v1299
        %1316 = vst [vmem:[%s217 + $0x48] sm:$0xff] %v1300
        %1317 = vst [vmem:[%s217 + $0x50] sm:$0xff] %v1301
        %1318 = vst [vmem:[%s217 + $0x58] sm:$0xff] %v1302
        %1319 = vst [vmem:[%s217 + $0x60] sm:$0xff] %v1303
        %1320 = vst [vmem:[%s217 + $0x68] sm:$0xff] %v1304
        %1321 = vst [vmem:[%s217 + $0x70] sm:$0xff] %v1305
        %1322 = vst [vmem:[%s217 + $0x78] sm:$0xff] %v1306
        %s1323 = scalar_lea.vmem %s193, 128 [#allocation3]
        %v1324 = vld [vmem:[%s1323] sm:$0xff]
        %v1325 = vld [vmem:[%s1323 + $0x8] sm:$0xff]
        %v1326 = vld [vmem:[%s1323 + $0x10] sm:$0xff]
        %v1327 = vld [vmem:[%s1323 + $0x18] sm:$0xff]
        %v1328 = vld [vmem:[%s1323 + $0x20] sm:$0xff]
        %v1329 = vld [vmem:[%s1323 + $0x28] sm:$0xff]
        %v1330 = vld [vmem:[%s1323 + $0x30] sm:$0xff]
        %v1331 = vld [vmem:[%s1323 + $0x38] sm:$0xff]
        %v1332 = vld [vmem:[%s1323 + $0x40] sm:$0xff]
        %v1333 = vld [vmem:[%s1323 + $0x48] sm:$0xff]
        %v1334 = vld [vmem:[%s1323 + $0x50] sm:$0xff]
        %v1335 = vld [vmem:[%s1323 + $0x58] sm:$0xff]
        %v1336 = vld [vmem:[%s1323 + $0x60] sm:$0xff]
        %v1337 = vld [vmem:[%s1323 + $0x68] sm:$0xff]
        %v1338 = vld [vmem:[%s1323 + $0x70] sm:$0xff]
        %v1339 = vld [vmem:[%s1323 + $0x78] sm:$0xff]
        %v1340 = vpack.c.bf16 %v1326, %v1324
        %v1341 = vpack.c.bf16 %v1327, %v1325
        %v1342 = vpack.c.bf16 %v1330, %v1328
        %v1343 = vpack.c.bf16 %v1331, %v1329
        %v1344 = vpack.c.bf16 %v1334, %v1332
        %v1345 = vpack.c.bf16 %v1335, %v1333
        %v1346 = vpack.c.bf16 %v1338, %v1336
        %v1347 = vpack.c.bf16 %v1339, %v1337
        %1348 = vmatprep.subr.bf16.mxu0 %v1341
        %1349 = vmatpush1.bf16.msra.mxu0 %v1340
        %1350 = vmatprep.subr.bf16.mxu0 %v1343
        %1351 = vmatpush1.bf16.msra.mxu0 %v1342
        %1352 = vmatprep.subr.bf16.mxu0 %v1345
        %1353 = vmatpush1.bf16.msra.mxu0 %v1344
        %1354 = vmatprep.subr.bf16.mxu0 %v1347
        %1355 = vmatpush1.bf16.msra.mxu0 %v1346
        %1356 = vmatprep.subr.bf16.mxu0 0
        %1357 = vmatpush1.bf16.msra.mxu0 0
        %1358 = vmatprep.subr.bf16.mxu0 0
        %1359 = vmatpush1.bf16.msra.mxu0 0
        %1360 = vmatprep.subr.bf16.mxu0 0
        %1361 = vmatpush1.bf16.msra.mxu0 0
        %1362 = vmatprep.subr.bf16.mxu0 0
        %1363 = vmatpush1.bf16.msra.mxu0 0
        %1364 = vmatprep.subr.bf16.mxu0 0
        %1365 = vmatpush1.bf16.msra.mxu0 0
        %1366 = vmatprep.subr.bf16.mxu0 0
        %1367 = vmatpush1.bf16.msra.mxu0 0
        %1368 = vmatprep.subr.bf16.mxu0 0
        %1369 = vmatpush1.bf16.msra.mxu0 0
        %1370 = vmatprep.subr.bf16.mxu0 0
        %1371 = vmatpush1.bf16.msra.mxu0 0
        %1372 = vmatprep.subr.bf16.mxu0 0
        %1373 = vmatpush1.bf16.msra.mxu0 0
        %1374 = vmatprep.subr.bf16.mxu0 0
        %1375 = vmatpush1.bf16.msra.mxu0 0
        %1376 = vmatprep.subr.bf16.mxu0 0
        %1377 = vmatpush1.bf16.msra.mxu0 0
        %1378 = vmatprep.subr.bf16.mxu0 0
        %1379 = vmatpush1.bf16.msra.mxu0 0
        %1380 = vmatprep.mubr.bf16.mxu0 0
        %1381 = vmatmul.mubr.bf16.gmra.mrb[0].mxu0 %v400
        %v1382 = vpop.f32.mrb[0].mxu0
        %v1383 = vadd.f32 %v281, %v1382
        %v1384 = vpop.f32.mrb[0].mxu0
        %v1385 = vadd.f32 %v281, %v1384
        %v1386 = vpop.f32.mrb[0].mxu0
        %v1387 = vadd.f32 %v286, %v1386
        %v1388 = vpop.f32.mrb[0].mxu0
        %v1389 = vadd.f32 %v286, %v1388
        %1390 = vmatprep.mubr.bf16.mxu0 0
        %1391 = vmatmul.mubr.bf16.gmra.mrb[0].mxu0 %v403
        %v1392 = vpop.f32.mrb[0].mxu0
        %v1393 = vadd.f32 %v291, %v1392
        %v1394 = vpop.f32.mrb[0].mxu0
        %v1395 = vadd.f32 %v291, %v1394
        %v1396 = vpop.f32.mrb[0].mxu0
        %v1397 = vadd.f32 %v296, %v1396
        %v1398 = vpop.f32.mrb[0].mxu0
        %v1399 = vadd.f32 %v296, %v1398
        %1400 = vmatprep.mubr.bf16.mxu0 0
        %1401 = vmatmul.mubr.bf16.gmra.mrb[0].mxu0 %v406
        %v1402 = vpop.f32.mrb[0].mxu0
        %v1403 = vadd.f32 %v301, %v1402
        %v1404 = vpop.f32.mrb[0].mxu0
        %v1405 = vadd.f32 %v301, %v1404
        %v1406 = vpop.f32.mrb[0].mxu0
        %v1407 = vadd.f32 %v306, %v1406
        %v1408 = vpop.f32.mrb[0].mxu0
        %v1409 = vadd.f32 %v306, %v1408
        %1410 = vmatprep.mubr.bf16.mxu0 0
        %1411 = vmatmul.mubr.bf16.gmra.mrb[0].mxu0 %v409
        %v1412 = vpop.f32.mrb[0].mxu0
        %v1413 = vadd.f32 %v311, %v1412
        %v1414 = vpop.f32.mrb[0].mxu0
        %v1415 = vadd.f32 %v311, %v1414
        %v1416 = vpop.f32.mrb[0].mxu0
        %v1417 = vadd.f32 %v316, %v1416
        %v1418 = vpop.f32.mrb[0].mxu0
        %v1419 = vadd.f32 %v316, %v1418
        %1420 = vmatprep.mubr.bf16.mxu0 0
        %1421 = vmatmul.mubr.bf16.gmra.mrb[0].mxu0 %v412
        %v1422 = vpop.f32.mrb[0].mxu0
        %v1423 = vadd.f32 %v321, %v1422
        %v1424 = vpop.f32.mrb[0].mxu0
        %v1425 = vadd.f32 %v321, %v1424
        %v1426 = vpop.f32.mrb[0].mxu0
        %v1427 = vadd.f32 %v326, %v1426
        %v1428 = vpop.f32.mrb[0].mxu0
        %v1429 = vadd.f32 %v326, %v1428
        %1430 = vmatprep.mubr.bf16.mxu0 0
        %1431 = vmatmul.mubr.bf16.gmra.mrb[0].mxu0 %v415
        %v1432 = vpop.f32.mrb[0].mxu0
        %v1433 = vadd.f32 %v331, %v1432
        %v1434 = vpop.f32.mrb[0].mxu0
        %v1435 = vadd.f32 %v331, %v1434
        %v1436 = vpop.f32.mrb[0].mxu0
        %v1437 = vadd.f32 %v336, %v1436
        %v1438 = vpop.f32.mrb[0].mxu0
        %v1439 = vadd.f32 %v336, %v1438
        %1440 = vmatprep.mubr.bf16.mxu0 0
        %1441 = vmatmul.mubr.bf16.gmra.mrb[0].mxu0 %v418
        %v1442 = vpop.f32.mrb[0].mxu0
        %v1443 = vadd.f32 %v341, %v1442
        %v1444 = vpop.f32.mrb[0].mxu0
        %v1445 = vadd.f32 %v341, %v1444
        %v1446 = vpop.f32.mrb[0].mxu0
        %v1447 = vadd.f32 %v346, %v1446
        %v1448 = vpop.f32.mrb[0].mxu0
        %v1449 = vadd.f32 %v346, %v1448
        %1450 = vmatprep.mubr.bf16.mxu0 0
        %1451 = vmatmul.mubr.bf16.gmra.mrb[0].mxu0 %v421
        %v1452 = vpop.f32.mrb[0].mxu0
        %v1453 = vadd.f32 %v351, %v1452
        %v1454 = vpop.f32.mrb[0].mxu0
        %v1455 = vadd.f32 %v351, %v1454
        %v1456 = vpop.f32.mrb[0].mxu0
        %v1457 = vadd.f32 %v356, %v1456
        %v1458 = vpop.f32.mrb[0].mxu0
        %v1459 = vadd.f32 %v356, %v1458
        %1460 = vdwg.mxu0
        %v1461 = vpack.c.bf16 %v1387, %v1383
        %v1462 = vpack.c.bf16 %v1389, %v1385
        %v1463 = vpack.c.bf16 %v1397, %v1393
        %v1464 = vpack.c.bf16 %v1399, %v1395
        %v1465 = vpack.c.bf16 %v1407, %v1403
        %v1466 = vpack.c.bf16 %v1409, %v1405
        %v1467 = vpack.c.bf16 %v1417, %v1413
        %v1468 = vpack.c.bf16 %v1419, %v1415
        %1469 = vxpose.xlu0.c.b16.start [1/8] %v1340, 128
        %1470 = vxpose.xlu0.c.b16.cont [2/8] %v1342, 128
        %1471 = vxpose.xlu0.c.b16.cont [3/8] %v1344, 128
        %1472 = vxpose.xlu0.c.b16.cont [4/8] %v1346, 128
        %1473 = vxpose.xlu0.c.b16.cont [5/8] 0, 128
        %1474 = vxpose.xlu0.c.b16.cont [6/8] 0, 128
        %1475 = vxpose.xlu0.c.b16.cont [7/8] 0, 128
        %1476 = vxpose.xlu0.c.b16.end [8/8] 0, 128
        %v1477 = vpop.trf.xlu0
        %v1478 = vpop.trf.xlu0
        %v1479 = vpop.trf.xlu0
        %v1480 = vpop.trf.xlu0
        %v1481 = vpop.trf.xlu0
        %v1482 = vpop.trf.xlu0
        %v1483 = vpop.trf.xlu0
        %v1484 = vpop.trf.xlu0
        %1485 = vxpose.xlu0.c.b16.start [1/8] %v1341, 128
        %1486 = vxpose.xlu0.c.b16.cont [2/8] %v1343, 128
        %1487 = vxpose.xlu0.c.b16.cont [3/8] %v1345, 128
        %1488 = vxpose.xlu0.c.b16.cont [4/8] %v1347, 128
        %1489 = vxpose.xlu0.c.b16.cont [5/8] 0, 128
        %1490 = vxpose.xlu0.c.b16.cont [6/8] 0, 128
        %1491 = vxpose.xlu0.c.b16.cont [7/8] 0, 128
        %1492 = vxpose.xlu0.c.b16.end [8/8] 0, 128
        %v1493 = vpop.trf.xlu0
        %v1494 = vpop.trf.xlu0
        %v1495 = vpop.trf.xlu0
        %v1496 = vpop.trf.xlu0
        %v1497 = vpop.trf.xlu0
        %v1498 = vpop.trf.xlu0
        %v1499 = vpop.trf.xlu0
        %v1500 = vpop.trf.xlu0
        %v1502 = vsel %vm398, %v1477, 0
        %v1505 = vsel %vm398, %v1478, 0
        %v1508 = vsel %vm398, %v1479, 0
        %v1511 = vsel %vm398, %v1480, 0
        %v1514 = vsel %vm398, %v1481, 0
        %v1517 = vsel %vm398, %v1482, 0
        %v1520 = vsel %vm398, %v1483, 0
        %v1523 = vsel %vm398, %v1484, 0
        %v1526 = vsel %vm398, %v1493, 0
        %v1529 = vsel %vm398, %v1494, 0
        %v1532 = vsel %vm398, %v1495, 0
        %v1535 = vsel %vm398, %v1496, 0
        %v1538 = vsel %vm398, %v1497, 0
        %v1541 = vsel %vm398, %v1498, 0
        %v1544 = vsel %vm398, %v1499, 0
        %v1547 = vsel %vm398, %v1500, 0
        %1549 = vmatprep.subr.bf16.mxu0 %v1462
        %1550 = vmatpush1.bf16.msra.mxu0 %v1461
        %1551 = vmatprep.subr.bf16.mxu0 %v1464
        %1552 = vmatpush1.bf16.msra.mxu0 %v1463
        %1553 = vmatprep.subr.bf16.mxu0 %v1466
        %1554 = vmatpush1.bf16.msra.mxu0 %v1465
        %1555 = vmatprep.subr.bf16.mxu0 %v1468
        %1556 = vmatpush1.bf16.msra.mxu0 %v1467
        %1557 = vmatprep.subr.bf16.mxu0 0
        %1558 = vmatpush1.bf16.msra.mxu0 0
        %1559 = vmatprep.subr.bf16.mxu0 0
        %1560 = vmatpush1.bf16.msra.mxu0 0
        %1561 = vmatprep.subr.bf16.mxu0 0
        %1562 = vmatpush1.bf16.msra.mxu0 0
        %1563 = vmatprep.subr.bf16.mxu0 0
        %1564 = vmatpush1.bf16.msra.mxu0 0
        %1565 = vmatprep.subr.bf16.mxu0 0
        %1566 = vmatpush1.bf16.msra.mxu0 0
        %1567 = vmatprep.subr.bf16.mxu0 0
        %1568 = vmatpush1.bf16.msra.mxu0 0
        %1569 = vmatprep.subr.bf16.mxu0 0
        %1570 = vmatpush1.bf16.msra.mxu0 0
        %1571 = vmatprep.subr.bf16.mxu0 0
        %1572 = vmatpush1.bf16.msra.mxu0 0
        %1573 = vmatprep.subr.bf16.mxu0 0
        %1574 = vmatpush1.bf16.msra.mxu0 0
        %1575 = vmatprep.subr.bf16.mxu0 0
        %1576 = vmatpush1.bf16.msra.mxu0 0
        %1577 = vmatprep.subr.bf16.mxu0 0
        %1578 = vmatpush1.bf16.msra.mxu0 0
        %1579 = vmatprep.subr.bf16.mxu0 0
        %1580 = vmatpush1.bf16.msra.mxu0 0
        %1581 = vmatprep.mubr.bf16.mxu0 0
        %1582 = vmatmul.mubr.bf16.gmra.mrb[0].mxu0 %v1502
        %v1583 = vpop.f32.mrb[0].mxu0
        %v1584 = vadd.f32 0.0, %v1583
        %v1585 = vpop.f32.mrb[0].mxu0
        %v1586 = vadd.f32 0.0, %v1585
        %v1587 = vpop.f32.mrb[0].mxu0
        %v1588 = vadd.f32 0.0, %v1587
        %v1589 = vpop.f32.mrb[0].mxu0
        %v1590 = vadd.f32 0.0, %v1589
        %1591 = vmatprep.mubr.bf16.mxu0 0
        %1592 = vmatmul.mubr.bf16.gmra.mrb[0].mxu0 %v1505
        %v1593 = vpop.f32.mrb[0].mxu0
        %v1594 = vadd.f32 0.0, %v1593
        %v1595 = vpop.f32.mrb[0].mxu0
        %v1596 = vadd.f32 0.0, %v1595
        %v1597 = vpop.f32.mrb[0].mxu0
        %v1598 = vadd.f32 0.0, %v1597
        %v1599 = vpop.f32.mrb[0].mxu0
        %v1600 = vadd.f32 0.0, %v1599
        %1601 = vmatprep.mubr.bf16.mxu0 0
        %1602 = vmatmul.mubr.bf16.gmra.mrb[0].mxu0 %v1508
        %v1603 = vpop.f32.mrb[0].mxu0
        %v1604 = vadd.f32 0.0, %v1603
        %v1605 = vpop.f32.mrb[0].mxu0
        %v1606 = vadd.f32 0.0, %v1605
        %v1607 = vpop.f32.mrb[0].mxu0
        %v1608 = vadd.f32 0.0, %v1607
        %v1609 = vpop.f32.mrb[0].mxu0
        %v1610 = vadd.f32 0.0, %v1609
        %1611 = vmatprep.mubr.bf16.mxu0 0
        %1612 = vmatmul.mubr.bf16.gmra.mrb[0].mxu0 %v1511
        %v1613 = vpop.f32.mrb[0].mxu0
        %v1614 = vadd.f32 0.0, %v1613
        %v1615 = vpop.f32.mrb[0].mxu0
        %v1616 = vadd.f32 0.0, %v1615
        %v1617 = vpop.f32.mrb[0].mxu0
        %v1618 = vadd.f32 0.0, %v1617
        %v1619 = vpop.f32.mrb[0].mxu0
        %v1620 = vadd.f32 0.0, %v1619
        %1621 = vmatprep.mubr.bf16.mxu0 0
        %1622 = vmatmul.mubr.bf16.gmra.mrb[0].mxu0 %v1514
        %v1623 = vpop.f32.mrb[0].mxu0
        %v1624 = vadd.f32 0.0, %v1623
        %v1625 = vpop.f32.mrb[0].mxu0
        %v1626 = vadd.f32 0.0, %v1625
        %v1627 = vpop.f32.mrb[0].mxu0
        %v1628 = vadd.f32 0.0, %v1627
        %v1629 = vpop.f32.mrb[0].mxu0
        %v1630 = vadd.f32 0.0, %v1629
        %1631 = vmatprep.mubr.bf16.mxu0 0
        %1632 = vmatmul.mubr.bf16.gmra.mrb[0].mxu0 %v1517
        %v1633 = vpop.f32.mrb[0].mxu0
        %v1634 = vadd.f32 0.0, %v1633
        %v1635 = vpop.f32.mrb[0].mxu0
        %v1636 = vadd.f32 0.0, %v1635
        %v1637 = vpop.f32.mrb[0].mxu0
        %v1638 = vadd.f32 0.0, %v1637
        %v1639 = vpop.f32.mrb[0].mxu0
        %v1640 = vadd.f32 0.0, %v1639
        %1641 = vmatprep.mubr.bf16.mxu0 0
        %1642 = vmatmul.mubr.bf16.gmra.mrb[0].mxu0 %v1520
        %v1643 = vpop.f32.mrb[0].mxu0
        %v1644 = vadd.f32 0.0, %v1643
        %v1645 = vpop.f32.mrb[0].mxu0
        %v1646 = vadd.f32 0.0, %v1645
        %v1647 = vpop.f32.mrb[0].mxu0
        %v1648 = vadd.f32 0.0, %v1647
        %v1649 = vpop.f32.mrb[0].mxu0
        %v1650 = vadd.f32 0.0, %v1649
        %1651 = vmatprep.mubr.bf16.mxu0 0
        %1652 = vmatmul.mubr.bf16.gmra.mrb[0].mxu0 %v1523
        %v1653 = vpop.f32.mrb[0].mxu0
        %v1654 = vadd.f32 0.0, %v1653
        %v1655 = vpop.f32.mrb[0].mxu0
        %v1656 = vadd.f32 0.0, %v1655
        %v1657 = vpop.f32.mrb[0].mxu0
        %v1658 = vadd.f32 0.0, %v1657
        %v1659 = vpop.f32.mrb[0].mxu0
        %v1660 = vadd.f32 0.0, %v1659
        %1661 = vmatprep.mubr.bf16.mxu0 0
        %1662 = vmatmul.mubr.bf16.gmra.mrb[0].mxu0 %v1526
        %v1663 = vpop.f32.mrb[0].mxu0
        %v1664 = vadd.f32 0.0, %v1663
        %v1665 = vpop.f32.mrb[0].mxu0
        %v1666 = vadd.f32 0.0, %v1665
        %v1667 = vpop.f32.mrb[0].mxu0
        %v1668 = vadd.f32 0.0, %v1667
        %v1669 = vpop.f32.mrb[0].mxu0
        %v1670 = vadd.f32 0.0, %v1669
        %1671 = vmatprep.mubr.bf16.mxu0 0
        %1672 = vmatmul.mubr.bf16.gmra.mrb[0].mxu0 %v1529
        %v1673 = vpop.f32.mrb[0].mxu0
        %v1674 = vadd.f32 0.0, %v1673
        %v1675 = vpop.f32.mrb[0].mxu0
        %v1676 = vadd.f32 0.0, %v1675
        %v1677 = vpop.f32.mrb[0].mxu0
        %v1678 = vadd.f32 0.0, %v1677
        %v1679 = vpop.f32.mrb[0].mxu0
        %v1680 = vadd.f32 0.0, %v1679
        %1681 = vmatprep.mubr.bf16.mxu0 0
        %1682 = vmatmul.mubr.bf16.gmra.mrb[0].mxu0 %v1532
        %v1683 = vpop.f32.mrb[0].mxu0
        %v1684 = vadd.f32 0.0, %v1683
        %v1685 = vpop.f32.mrb[0].mxu0
        %v1686 = vadd.f32 0.0, %v1685
        %v1687 = vpop.f32.mrb[0].mxu0
        %v1688 = vadd.f32 0.0, %v1687
        %v1689 = vpop.f32.mrb[0].mxu0
        %v1690 = vadd.f32 0.0, %v1689
        %1691 = vmatprep.mubr.bf16.mxu0 0
        %1692 = vmatmul.mubr.bf16.gmra.mrb[0].mxu0 %v1535
        %v1693 = vpop.f32.mrb[0].mxu0
        %v1694 = vadd.f32 0.0, %v1693
        %v1695 = vpop.f32.mrb[0].mxu0
        %v1696 = vadd.f32 0.0, %v1695
        %v1697 = vpop.f32.mrb[0].mxu0
        %v1698 = vadd.f32 0.0, %v1697
        %v1699 = vpop.f32.mrb[0].mxu0
        %v1700 = vadd.f32 0.0, %v1699
        %1701 = vmatprep.mubr.bf16.mxu0 0
        %1702 = vmatmul.mubr.bf16.gmra.mrb[0].mxu0 %v1538
        %v1703 = vpop.f32.mrb[0].mxu0
        %v1704 = vadd.f32 0.0, %v1703
        %v1705 = vpop.f32.mrb[0].mxu0
        %v1706 = vadd.f32 0.0, %v1705
        %v1707 = vpop.f32.mrb[0].mxu0
        %v1708 = vadd.f32 0.0, %v1707
        %v1709 = vpop.f32.mrb[0].mxu0
        %v1710 = vadd.f32 0.0, %v1709
        %1711 = vmatprep.mubr.bf16.mxu0 0
        %1712 = vmatmul.mubr.bf16.gmra.mrb[0].mxu0 %v1541
        %v1713 = vpop.f32.mrb[0].mxu0
        %v1714 = vadd.f32 0.0, %v1713
        %v1715 = vpop.f32.mrb[0].mxu0
        %v1716 = vadd.f32 0.0, %v1715
        %v1717 = vpop.f32.mrb[0].mxu0
        %v1718 = vadd.f32 0.0, %v1717
        %v1719 = vpop.f32.mrb[0].mxu0
        %v1720 = vadd.f32 0.0, %v1719
        %1721 = vmatprep.mubr.bf16.mxu0 0
        %1722 = vmatmul.mubr.bf16.gmra.mrb[0].mxu0 %v1544
        %v1723 = vpop.f32.mrb[0].mxu0
        %v1724 = vadd.f32 0.0, %v1723
        %v1725 = vpop.f32.mrb[0].mxu0
        %v1726 = vadd.f32 0.0, %v1725
        %v1727 = vpop.f32.mrb[0].mxu0
        %v1728 = vadd.f32 0.0, %v1727
        %v1729 = vpop.f32.mrb[0].mxu0
        %v1730 = vadd.f32 0.0, %v1729
        %1731 = vmatprep.mubr.bf16.mxu0 0
        %1732 = vmatmul.mubr.bf16.gmra.mrb[0].mxu0 %v1547
        %v1733 = vpop.f32.mrb[0].mxu0
        %v1734 = vadd.f32 0.0, %v1733
        %v1735 = vpop.f32.mrb[0].mxu0
        %v1736 = vadd.f32 0.0, %v1735
        %v1737 = vpop.f32.mrb[0].mxu0
        %v1738 = vadd.f32 0.0, %v1737
        %v1739 = vpop.f32.mrb[0].mxu0
        %v1740 = vadd.f32 0.0, %v1739
        %1741 = vdwg.mxu0
        %v1742 = vmax.f32 %v1584, %v1594
        %v1743 = vmax.f32 %v1588, %v1598
        %v1744 = vmax.f32 %v1742, %v1604
        %v1745 = vmax.f32 %v1743, %v1608
        %v1746 = vmax.f32 %v1744, %v1614
        %v1747 = vmax.f32 %v1745, %v1618
        %v1748 = vmax.f32 %v1746, %v1624
        %v1749 = vmax.f32 %v1747, %v1628
        %v1750 = vmax.f32 %v1748, %v1634
        %v1751 = vmax.f32 %v1749, %v1638
        %v1752 = vmax.f32 %v1750, %v1644
        %v1753 = vmax.f32 %v1751, %v1648
        %v1754 = vmax.f32 %v1752, %v1654
        %v1755 = vmax.f32 %v1753, %v1658
        %v1756 = vmax.f32 %v1754, %v1664
        %v1757 = vmax.f32 %v1755, %v1668
        %v1758 = vmax.f32 %v1756, %v1674
        %v1759 = vmax.f32 %v1757, %v1678
        %v1760 = vmax.f32 %v1758, %v1684
        %v1761 = vmax.f32 %v1759, %v1688
        %v1762 = vmax.f32 %v1760, %v1694
        %v1763 = vmax.f32 %v1761, %v1698
        %v1764 = vmax.f32 %v1762, %v1704
        %v1765 = vmax.f32 %v1763, %v1708
        %v1766 = vmax.f32 %v1764, %v1714
        %v1767 = vmax.f32 %v1765, %v1718
        %v1768 = vmax.f32 %v1766, %v1724
        %v1769 = vmax.f32 %v1767, %v1728
        %v1770 = vmax.f32 %v1768, %v1734
        %v1771 = vmax.f32 %v1769, %v1738
        %v1772 = vmax.f32 %v1770, %v1771
        %v1773 = vrot.slane %v1772, 4
        %v1774 = vmax.f32 %v1772, %v1773
        %v1775 = vrot.slane %v1774, 2
        %v1776 = vmax.f32 %v1774, %v1775
        %v1777 = vrot.slane %v1776, 1
        %v1778 = vmax.f32 %v1776, %v1777
        %v1779 = vmax.f32 %v1586, %v1596
        %v1780 = vmax.f32 %v1590, %v1600
        %v1781 = vmax.f32 %v1779, %v1606
        %v1782 = vmax.f32 %v1780, %v1610
        %v1783 = vmax.f32 %v1781, %v1616
        %v1784 = vmax.f32 %v1782, %v1620
        %v1785 = vmax.f32 %v1783, %v1626
        %v1786 = vmax.f32 %v1784, %v1630
        %v1787 = vmax.f32 %v1785, %v1636
        %v1788 = vmax.f32 %v1786, %v1640
        %v1789 = vmax.f32 %v1787, %v1646
        %v1790 = vmax.f32 %v1788, %v1650
        %v1791 = vmax.f32 %v1789, %v1656
        %v1792 = vmax.f32 %v1790, %v1660
        %v1793 = vmax.f32 %v1791, %v1666
        %v1794 = vmax.f32 %v1792, %v1670
        %v1795 = vmax.f32 %v1793, %v1676
        %v1796 = vmax.f32 %v1794, %v1680
        %v1797 = vmax.f32 %v1795, %v1686
        %v1798 = vmax.f32 %v1796, %v1690
        %v1799 = vmax.f32 %v1797, %v1696
        %v1800 = vmax.f32 %v1798, %v1700
        %v1801 = vmax.f32 %v1799, %v1706
        %v1802 = vmax.f32 %v1800, %v1710
        %v1803 = vmax.f32 %v1801, %v1716
        %v1804 = vmax.f32 %v1802, %v1720
        %v1805 = vmax.f32 %v1803, %v1726
        %v1806 = vmax.f32 %v1804, %v1730
        %v1807 = vmax.f32 %v1805, %v1736
        %v1808 = vmax.f32 %v1806, %v1740
        %v1809 = vmax.f32 %v1807, %v1808
        %v1810 = vrot.slane %v1809, 4
        %v1811 = vmax.f32 %v1809, %v1810
        %v1812 = vrot.slane %v1811, 2
        %v1813 = vmax.f32 %v1811, %v1812
        %v1814 = vrot.slane %v1813, 1
        %v1815 = vmax.f32 %v1813, %v1814
        %v1816 = vsub.f32 %v1584, %v1778
        %v1817 = vsub.f32 %v1586, %v1815
        %v1818 = vsub.f32 %v1588, %v1778
        %v1819 = vsub.f32 %v1590, %v1815
        %v1820 = vsub.f32 %v1594, %v1778
        %v1821 = vsub.f32 %v1596, %v1815
        %v1822 = vsub.f32 %v1598, %v1778
        %v1823 = vsub.f32 %v1600, %v1815
        %v1824 = vsub.f32 %v1604, %v1778
        %v1825 = vsub.f32 %v1606, %v1815
        %v1826 = vsub.f32 %v1608, %v1778
        %v1827 = vsub.f32 %v1610, %v1815
        %v1828 = vsub.f32 %v1614, %v1778
        %v1829 = vsub.f32 %v1616, %v1815
        %v1830 = vsub.f32 %v1618, %v1778
        %v1831 = vsub.f32 %v1620, %v1815
        %v1832 = vsub.f32 %v1624, %v1778
        %v1833 = vsub.f32 %v1626, %v1815
        %v1834 = vsub.f32 %v1628, %v1778
        %v1835 = vsub.f32 %v1630, %v1815
        %v1836 = vsub.f32 %v1634, %v1778
        %v1837 = vsub.f32 %v1636, %v1815
        %v1838 = vsub.f32 %v1638, %v1778
        %v1839 = vsub.f32 %v1640, %v1815
        %v1840 = vsub.f32 %v1644, %v1778
        %v1841 = vsub.f32 %v1646, %v1815
        %v1842 = vsub.f32 %v1648, %v1778
        %v1843 = vsub.f32 %v1650, %v1815
        %v1844 = vsub.f32 %v1654, %v1778
        %v1845 = vsub.f32 %v1656, %v1815
        %v1846 = vsub.f32 %v1658, %v1778
        %v1847 = vsub.f32 %v1660, %v1815
        %v1848 = vsub.f32 %v1664, %v1778
        %v1849 = vsub.f32 %v1666, %v1815
        %v1850 = vsub.f32 %v1668, %v1778
        %v1851 = vsub.f32 %v1670, %v1815
        %v1852 = vsub.f32 %v1674, %v1778
        %v1853 = vsub.f32 %v1676, %v1815
        %v1854 = vsub.f32 %v1678, %v1778
        %v1855 = vsub.f32 %v1680, %v1815
        %v1856 = vsub.f32 %v1684, %v1778
        %v1857 = vsub.f32 %v1686, %v1815
        %v1858 = vsub.f32 %v1688, %v1778
        %v1859 = vsub.f32 %v1690, %v1815
        %v1860 = vsub.f32 %v1694, %v1778
        %v1861 = vsub.f32 %v1696, %v1815
        %v1862 = vsub.f32 %v1698, %v1778
        %v1863 = vsub.f32 %v1700, %v1815
        %v1864 = vsub.f32 %v1704, %v1778
        %v1865 = vsub.f32 %v1706, %v1815
        %v1866 = vsub.f32 %v1708, %v1778
        %v1867 = vsub.f32 %v1710, %v1815
        %v1868 = vsub.f32 %v1714, %v1778
        %v1869 = vsub.f32 %v1716, %v1815
        %v1870 = vsub.f32 %v1718, %v1778
        %v1871 = vsub.f32 %v1720, %v1815
        %v1872 = vsub.f32 %v1724, %v1778
        %v1873 = vsub.f32 %v1726, %v1815
        %v1874 = vsub.f32 %v1728, %v1778
        %v1875 = vsub.f32 %v1730, %v1815
        %v1876 = vsub.f32 %v1734, %v1778
        %v1877 = vsub.f32 %v1736, %v1815
        %v1878 = vsub.f32 %v1738, %v1778
        %v1879 = vsub.f32 %v1740, %v1815
        %v1880 = vmul.f32 %v1816, 1.442695
        %v1881 = vpow.pop %v1880
        %v1882 = vmul.f32 %v1817, 1.442695
        %v1883 = vpow.pop %v1882
        %v1884 = vmul.f32 %v1818, 1.442695
        %v1885 = vpow.pop %v1884
        %v1886 = vmul.f32 %v1819, 1.442695
        %v1887 = vpow.pop %v1886
        %v1888 = vmul.f32 %v1820, 1.442695
        %v1889 = vpow.pop %v1888
        %v1890 = vmul.f32 %v1821, 1.442695
        %v1891 = vpow.pop %v1890
        %v1892 = vmul.f32 %v1822, 1.442695
        %v1893 = vpow.pop %v1892
        %v1894 = vmul.f32 %v1823, 1.442695
        %v1895 = vpow.pop %v1894
        %v1896 = vmul.f32 %v1824, 1.442695
        %v1897 = vpow.pop %v1896
        %v1898 = vmul.f32 %v1825, 1.442695
        %v1899 = vpow.pop %v1898
        %v1900 = vmul.f32 %v1826, 1.442695
        %v1901 = vpow.pop %v1900
        %v1902 = vmul.f32 %v1827, 1.442695
        %v1903 = vpow.pop %v1902
        %v1904 = vmul.f32 %v1828, 1.442695
        %v1905 = vpow.pop %v1904
        %v1906 = vmul.f32 %v1829, 1.442695
        %v1907 = vpow.pop %v1906
        %v1908 = vmul.f32 %v1830, 1.442695
        %v1909 = vpow.pop %v1908
        %v1910 = vmul.f32 %v1831, 1.442695
        %v1911 = vpow.pop %v1910
        %v1912 = vmul.f32 %v1832, 1.442695
        %v1913 = vpow.pop %v1912
        %v1914 = vmul.f32 %v1833, 1.442695
        %v1915 = vpow.pop %v1914
        %v1916 = vmul.f32 %v1834, 1.442695
        %v1917 = vpow.pop %v1916
        %v1918 = vmul.f32 %v1835, 1.442695
        %v1919 = vpow.pop %v1918
        %v1920 = vmul.f32 %v1836, 1.442695
        %v1921 = vpow.pop %v1920
        %v1922 = vmul.f32 %v1837, 1.442695
        %v1923 = vpow.pop %v1922
        %v1924 = vmul.f32 %v1838, 1.442695
        %v1925 = vpow.pop %v1924
        %v1926 = vmul.f32 %v1839, 1.442695
        %v1927 = vpow.pop %v1926
        %v1928 = vmul.f32 %v1840, 1.442695
        %v1929 = vpow.pop %v1928
        %v1930 = vmul.f32 %v1841, 1.442695
        %v1931 = vpow.pop %v1930
        %v1932 = vmul.f32 %v1842, 1.442695
        %v1933 = vpow.pop %v1932
        %v1934 = vmul.f32 %v1843, 1.442695
        %v1935 = vpow.pop %v1934
        %v1936 = vmul.f32 %v1844, 1.442695
        %v1937 = vpow.pop %v1936
        %v1938 = vmul.f32 %v1845, 1.442695
        %v1939 = vpow.pop %v1938
        %v1940 = vmul.f32 %v1846, 1.442695
        %v1941 = vpow.pop %v1940
        %v1942 = vmul.f32 %v1847, 1.442695
        %v1943 = vpow.pop %v1942
        %v1944 = vmul.f32 %v1848, 1.442695
        %v1945 = vpow.pop %v1944
        %v1946 = vmul.f32 %v1849, 1.442695
        %v1947 = vpow.pop %v1946
        %v1948 = vmul.f32 %v1850, 1.442695
        %v1949 = vpow.pop %v1948
        %v1950 = vmul.f32 %v1851, 1.442695
        %v1951 = vpow.pop %v1950
        %v1952 = vmul.f32 %v1852, 1.442695
        %v1953 = vpow.pop %v1952
        %v1954 = vmul.f32 %v1853, 1.442695
        %v1955 = vpow.pop %v1954
        %v1956 = vmul.f32 %v1854, 1.442695
        %v1957 = vpow.pop %v1956
        %v1958 = vmul.f32 %v1855, 1.442695
        %v1959 = vpow.pop %v1958
        %v1960 = vmul.f32 %v1856, 1.442695
        %v1961 = vpow.pop %v1960
        %v1962 = vmul.f32 %v1857, 1.442695
        %v1963 = vpow.pop %v1962
        %v1964 = vmul.f32 %v1858, 1.442695
        %v1965 = vpow.pop %v1964
        %v1966 = vmul.f32 %v1859, 1.442695
        %v1967 = vpow.pop %v1966
        %v1968 = vmul.f32 %v1860, 1.442695
        %v1969 = vpow.pop %v1968
        %v1970 = vmul.f32 %v1861, 1.442695
        %v1971 = vpow.pop %v1970
        %v1972 = vmul.f32 %v1862, 1.442695
        %v1973 = vpow.pop %v1972
        %v1974 = vmul.f32 %v1863, 1.442695
        %v1975 = vpow.pop %v1974
        %v1976 = vmul.f32 %v1864, 1.442695
        %v1977 = vpow.pop %v1976
        %v1978 = vmul.f32 %v1865, 1.442695
        %v1979 = vpow.pop %v1978
        %v1980 = vmul.f32 %v1866, 1.442695
        %v1981 = vpow.pop %v1980
        %v1982 = vmul.f32 %v1867, 1.442695
        %v1983 = vpow.pop %v1982
        %v1984 = vmul.f32 %v1868, 1.442695
        %v1985 = vpow.pop %v1984
        %v1986 = vmul.f32 %v1869, 1.442695
        %v1987 = vpow.pop %v1986
        %v1988 = vmul.f32 %v1870, 1.442695
        %v1989 = vpow.pop %v1988
        %v1990 = vmul.f32 %v1871, 1.442695
        %v1991 = vpow.pop %v1990
        %v1992 = vmul.f32 %v1872, 1.442695
        %v1993 = vpow.pop %v1992
        %v1994 = vmul.f32 %v1873, 1.442695
        %v1995 = vpow.pop %v1994
        %v1996 = vmul.f32 %v1874, 1.442695
        %v1997 = vpow.pop %v1996
        %v1998 = vmul.f32 %v1875, 1.442695
        %v1999 = vpow.pop %v1998
        %v2000 = vmul.f32 %v1876, 1.442695
        %v2001 = vpow.pop %v2000
        %v2002 = vmul.f32 %v1877, 1.442695
        %v2003 = vpow.pop %v2002
        %v2004 = vmul.f32 %v1878, 1.442695
        %v2005 = vpow.pop %v2004
        %v2006 = vmul.f32 %v1879, 1.442695
        %v2007 = vpow.pop %v2006
        %v2008 = vadd.f32 %v1881, %v1885
        %v2009 = vadd.f32 %v2008, %v1889
        %v2010 = vadd.f32 %v2009, %v1893
        %v2011 = vadd.f32 %v2010, %v1897
        %v2012 = vadd.f32 %v2011, %v1901
        %v2013 = vadd.f32 %v2012, %v1905
        %v2014 = vadd.f32 %v2013, %v1909
        %v2015 = vadd.f32 %v2014, %v1913
        %v2016 = vadd.f32 %v2015, %v1917
        %v2017 = vadd.f32 %v2016, %v1921
        %v2018 = vadd.f32 %v2017, %v1925
        %v2019 = vadd.f32 %v2018, %v1929
        %v2020 = vadd.f32 %v2019, %v1933
        %v2021 = vadd.f32 %v2020, %v1937
        %v2022 = vadd.f32 %v2021, %v1941
        %v2023 = vadd.f32 %v2022, %v1945
        %v2024 = vadd.f32 %v2023, %v1949
        %v2025 = vadd.f32 %v2024, %v1953
        %v2026 = vadd.f32 %v2025, %v1957
        %v2027 = vadd.f32 %v2026, %v1961
        %v2028 = vadd.f32 %v2027, %v1965
        %v2029 = vadd.f32 %v2028, %v1969
        %v2030 = vadd.f32 %v2029, %v1973
        %v2031 = vadd.f32 %v2030, %v1977
        %v2032 = vadd.f32 %v2031, %v1981
        %v2033 = vadd.f32 %v2032, %v1985
        %v2034 = vadd.f32 %v2033, %v1989
        %v2035 = vadd.f32 %v2034, %v1993
        %v2036 = vadd.f32 %v2035, %v1997
        %v2037 = vadd.f32 %v2036, %v2001
        %v2038 = vadd.f32 %v2037, %v2005
        %v2039 = vrot.slane %v2038, 4
        %v2040 = vadd.f32 %v2038, %v2039
        %v2041 = vrot.slane %v2040, 2
        %v2042 = vadd.f32 %v2040, %v2041
        %v2043 = vrot.slane %v2042, 1
        %v2044 = vadd.f32 %v2042, %v2043
        %v2045 = vadd.f32 %v1883, %v1887
        %v2046 = vadd.f32 %v2045, %v1891
        %v2047 = vadd.f32 %v2046, %v1895
        %v2048 = vadd.f32 %v2047, %v1899
        %v2049 = vadd.f32 %v2048, %v1903
        %v2050 = vadd.f32 %v2049, %v1907
        %v2051 = vadd.f32 %v2050, %v1911
        %v2052 = vadd.f32 %v2051, %v1915
        %v2053 = vadd.f32 %v2052, %v1919
        %v2054 = vadd.f32 %v2053, %v1923
        %v2055 = vadd.f32 %v2054, %v1927
        %v2056 = vadd.f32 %v2055, %v1931
        %v2057 = vadd.f32 %v2056, %v1935
        %v2058 = vadd.f32 %v2057, %v1939
        %v2059 = vadd.f32 %v2058, %v1943
        %v2060 = vadd.f32 %v2059, %v1947
        %v2061 = vadd.f32 %v2060, %v1951
        %v2062 = vadd.f32 %v2061, %v1955
        %v2063 = vadd.f32 %v2062, %v1959
        %v2064 = vadd.f32 %v2063, %v1963
        %v2065 = vadd.f32 %v2064, %v1967
        %v2066 = vadd.f32 %v2065, %v1971
        %v2067 = vadd.f32 %v2066, %v1975
        %v2068 = vadd.f32 %v2067, %v1979
        %v2069 = vadd.f32 %v2068, %v1983
        %v2070 = vadd.f32 %v2069, %v1987
        %v2071 = vadd.f32 %v2070, %v1991
        %v2072 = vadd.f32 %v2071, %v1995
        %v2073 = vadd.f32 %v2072, %v1999
        %v2074 = vadd.f32 %v2073, %v2003
        %v2075 = vadd.f32 %v2074, %v2007
        %v2076 = vrot.slane %v2075, 4
        %v2077 = vadd.f32 %v2075, %v2076
        %v2078 = vrot.slane %v2077, 2
        %v2079 = vadd.f32 %v2077, %v2078
        %v2080 = vrot.slane %v2079, 1
        %v2081 = vadd.f32 %v2079, %v2080
        %v2082 = vpack.c.bf16 %v1427, %v1423
        %v2083 = vpack.c.bf16 %v1429, %v1425
        %v2084 = vpack.c.bf16 %v1437, %v1433
        %v2085 = vpack.c.bf16 %v1439, %v1435
        %v2086 = vpack.c.bf16 %v1447, %v1443
        %v2087 = vpack.c.bf16 %v1449, %v1445
        %v2088 = vpack.c.bf16 %v1457, %v1453
        %v2089 = vpack.c.bf16 %v1459, %v1455
        %v2090 = vpack.c.bf16 %v1885, %v1881
        %v2091 = vpack.c.bf16 %v1887, %v1883
        %v2092 = vpack.c.bf16 %v1893, %v1889
        %v2093 = vpack.c.bf16 %v1895, %v1891
        %v2094 = vpack.c.bf16 %v1901, %v1897
        %v2095 = vpack.c.bf16 %v1903, %v1899
        %v2096 = vpack.c.bf16 %v1909, %v1905
        %v2097 = vpack.c.bf16 %v1911, %v1907
        %v2098 = vpack.c.bf16 %v1917, %v1913
        %v2099 = vpack.c.bf16 %v1919, %v1915
        %v2100 = vpack.c.bf16 %v1925, %v1921
        %v2101 = vpack.c.bf16 %v1927, %v1923
        %v2102 = vpack.c.bf16 %v1933, %v1929
        %v2103 = vpack.c.bf16 %v1935, %v1931
        %v2104 = vpack.c.bf16 %v1941, %v1937
        %v2105 = vpack.c.bf16 %v1943, %v1939
        %v2106 = vpack.c.bf16 %v1949, %v1945
        %v2107 = vpack.c.bf16 %v1951, %v1947
        %v2108 = vpack.c.bf16 %v1957, %v1953
        %v2109 = vpack.c.bf16 %v1959, %v1955
        %v2110 = vpack.c.bf16 %v1965, %v1961
        %v2111 = vpack.c.bf16 %v1967, %v1963
        %v2112 = vpack.c.bf16 %v1973, %v1969
        %v2113 = vpack.c.bf16 %v1975, %v1971
        %v2114 = vpack.c.bf16 %v1981, %v1977
        %v2115 = vpack.c.bf16 %v1983, %v1979
        %v2116 = vpack.c.bf16 %v1989, %v1985
        %v2117 = vpack.c.bf16 %v1991, %v1987
        %v2118 = vpack.c.bf16 %v1997, %v1993
        %v2119 = vpack.c.bf16 %v1999, %v1995
        %v2120 = vpack.c.bf16 %v2005, %v2001
        %v2121 = vpack.c.bf16 %v2007, %v2003
        %2122 = vmatprep.subr.bf16.mxu0 %v2091
        %2123 = vmatpush1.bf16.msra.mxu0 %v2090
        %2124 = vmatprep.subr.bf16.mxu0 %v2093
        %2125 = vmatpush1.bf16.msra.mxu0 %v2092
        %2126 = vmatprep.subr.bf16.mxu0 %v2095
        %2127 = vmatpush1.bf16.msra.mxu0 %v2094
        %2128 = vmatprep.subr.bf16.mxu0 %v2097
        %2129 = vmatpush1.bf16.msra.mxu0 %v2096
        %2130 = vmatprep.subr.bf16.mxu0 %v2099
        %2131 = vmatpush1.bf16.msra.mxu0 %v2098
        %2132 = vmatprep.subr.bf16.mxu0 %v2101
        %2133 = vmatpush1.bf16.msra.mxu0 %v2100
        %2134 = vmatprep.subr.bf16.mxu0 %v2103
        %2135 = vmatpush1.bf16.msra.mxu0 %v2102
        %2136 = vmatprep.subr.bf16.mxu0 %v2105
        %2137 = vmatpush1.bf16.msra.mxu0 %v2104
        %2138 = vmatprep.subr.bf16.mxu0 %v2107
        %2139 = vmatpush1.bf16.msra.mxu0 %v2106
        %2140 = vmatprep.subr.bf16.mxu0 %v2109
        %2141 = vmatpush1.bf16.msra.mxu0 %v2108
        %2142 = vmatprep.subr.bf16.mxu0 %v2111
        %2143 = vmatpush1.bf16.msra.mxu0 %v2110
        %2144 = vmatprep.subr.bf16.mxu0 %v2113
        %2145 = vmatpush1.bf16.msra.mxu0 %v2112
        %2146 = vmatprep.subr.bf16.mxu0 %v2115
        %2147 = vmatpush1.bf16.msra.mxu0 %v2114
        %2148 = vmatprep.subr.bf16.mxu0 %v2117
        %2149 = vmatpush1.bf16.msra.mxu0 %v2116
        %2150 = vmatprep.subr.bf16.mxu0 %v2119
        %2151 = vmatpush1.bf16.msra.mxu0 %v2118
        %2152 = vmatprep.subr.bf16.mxu0 %v2121
        %2153 = vmatpush1.bf16.msra.mxu0 %v2120
        %2154 = vmatprep.mubr.bf16.mxu0 %v2083
        %2155 = vmatmul.mubr.bf16.gmra.mrb[0].mxu0 %v2082
        %v2156 = vpop.f32.mrb[0].mxu0
        %v2157 = vadd.f32 0.0, %v2156
        %v2158 = vpop.f32.mrb[0].mxu0
        %v2159 = vadd.f32 0.0, %v2158
        %v2160 = vpop.f32.mrb[0].mxu0
        %v2161 = vadd.f32 0.0, %v2160
        %v2162 = vpop.f32.mrb[0].mxu0
        %v2163 = vadd.f32 0.0, %v2162
        %2164 = vmatprep.mubr.bf16.mxu0 %v2085
        %2165 = vmatmul.mubr.bf16.gmra.mrb[0].mxu0 %v2084
        %v2166 = vpop.f32.mrb[0].mxu0
        %v2167 = vadd.f32 0.0, %v2166
        %v2168 = vpop.f32.mrb[0].mxu0
        %v2169 = vadd.f32 0.0, %v2168
        %v2170 = vpop.f32.mrb[0].mxu0
        %v2171 = vadd.f32 0.0, %v2170
        %v2172 = vpop.f32.mrb[0].mxu0
        %v2173 = vadd.f32 0.0, %v2172
        %2174 = vmatprep.mubr.bf16.mxu0 %v2087
        %2175 = vmatmul.mubr.bf16.gmra.mrb[0].mxu0 %v2086
        %v2176 = vpop.f32.mrb[0].mxu0
        %v2177 = vadd.f32 0.0, %v2176
        %v2178 = vpop.f32.mrb[0].mxu0
        %v2179 = vadd.f32 0.0, %v2178
        %v2180 = vpop.f32.mrb[0].mxu0
        %v2181 = vadd.f32 0.0, %v2180
        %v2182 = vpop.f32.mrb[0].mxu0
        %v2183 = vadd.f32 0.0, %v2182
        %2184 = vmatprep.mubr.bf16.mxu0 %v2089
        %2185 = vmatmul.mubr.bf16.gmra.mrb[0].mxu0 %v2088
        %v2186 = vpop.f32.mrb[0].mxu0
        %v2187 = vadd.f32 0.0, %v2186
        %v2188 = vpop.f32.mrb[0].mxu0
        %v2189 = vadd.f32 0.0, %v2188
        %v2190 = vpop.f32.mrb[0].mxu0
        %v2191 = vadd.f32 0.0, %v2190
        %v2192 = vpop.f32.mrb[0].mxu0
        %v2193 = vadd.f32 0.0, %v2192
        %2194 = vdwg.mxu0
        %v2195 = vrcp.pop %v2044
        %v2196 = vrcp.pop %v2081
        %v2197 = vmul.f32 %v1272, %v2195
        %v2198 = vmul.f32 %v1272, %v2196
        %v2199 = vmul.f32 %v2157, %v2197
        %v2200 = vmul.f32 %v2159, %v2198
        %v2201 = vmul.f32 %v2161, %v2197
        %v2202 = vmul.f32 %v2163, %v2198
        %v2203 = vmul.f32 %v2167, %v2197
        %v2204 = vmul.f32 %v2169, %v2198
        %v2205 = vmul.f32 %v2171, %v2197
        %v2206 = vmul.f32 %v2173, %v2198
        %v2207 = vmul.f32 %v2177, %v2197
        %v2208 = vmul.f32 %v2179, %v2198
        %v2209 = vmul.f32 %v2181, %v2197
        %v2210 = vmul.f32 %v2183, %v2198
        %v2211 = vmul.f32 %v2187, %v2197
        %v2212 = vmul.f32 %v2189, %v2198
        %v2213 = vmul.f32 %v2191, %v2197
        %v2214 = vmul.f32 %v2193, %v2198
        %v2215 = vadd.f32 %v2199, %v1324
        %v2216 = vadd.f32 %v2200, %v1325
        %v2217 = vadd.f32 %v2201, %v1326
        %v2218 = vadd.f32 %v2202, %v1327
        %v2219 = vadd.f32 %v2203, %v1328
        %v2220 = vadd.f32 %v2204, %v1329
        %v2221 = vadd.f32 %v2205, %v1330
        %v2222 = vadd.f32 %v2206, %v1331
        %v2223 = vadd.f32 %v2207, %v1332
        %v2224 = vadd.f32 %v2208, %v1333
        %v2225 = vadd.f32 %v2209, %v1334
        %v2226 = vadd.f32 %v2210, %v1335
        %v2227 = vadd.f32 %v2211, %v1336
        %v2228 = vadd.f32 %v2212, %v1337
        %v2229 = vadd.f32 %v2213, %v1338
        %v2230 = vadd.f32 %v2214, %v1339
        %s2231 = scalar_lea.vmem %s217, 128 [#allocation6]
        %2232 = vst [vmem:[%s2231] sm:$0xff] %v2215
        %2233 = vst [vmem:[%s2231 + $0x8] sm:$0xff] %v2216
        %2234 = vst [vmem:[%s2231 + $0x10] sm:$0xff] %v2217
        %2235 = vst [vmem:[%s2231 + $0x18] sm:$0xff] %v2218
        %2236 = vst [vmem:[%s2231 + $0x20] sm:$0xff] %v2219
        %2237 = vst [vmem:[%s2231 + $0x28] sm:$0xff] %v2220
        %2238 = vst [vmem:[%s2231 + $0x30] sm:$0xff] %v2221
        %2239 = vst [vmem:[%s2231 + $0x38] sm:$0xff] %v2222
        %2240 = vst [vmem:[%s2231 + $0x40] sm:$0xff] %v2223
        %2241 = vst [vmem:[%s2231 + $0x48] sm:$0xff] %v2224
        %2242 = vst [vmem:[%s2231 + $0x50] sm:$0xff] %v2225
        %2243 = vst [vmem:[%s2231 + $0x58] sm:$0xff] %v2226
        %2244 = vst [vmem:[%s2231 + $0x60] sm:$0xff] %v2227
        %2245 = vst [vmem:[%s2231 + $0x68] sm:$0xff] %v2228
        %2246 = vst [vmem:[%s2231 + $0x70] sm:$0xff] %v2229
        %2247 = vst [vmem:[%s2231 + $0x78] sm:$0xff] %v2230
        %s2248 = sand.u32 %s119, 1
        %s2249 = scalar_lea.sflag [#allocation5], %s2248
        %s2250 = sand.u32 %s119, 1
        %s2251 = smul.addr %s2250, 256
        %s2252 = scalar_lea.vmem [#allocation6], %s2251
        // Predicated region
        $region41: #{tpu_custom_call.1} parent=35 // pred_check
          %p2253 = pneg %p129
        $region42: #{tpu_custom_call.1} parent=35 // pred_check_branch
          %2255 = sbr.rel (%p2253) target = $region44
        $region43: #{tpu_custom_call.1} parent=35 // pred_region
          %s2256 = smul.u32 2, %s22
          %s2258 = ssub.s32 4096, 4096
          %2259 = vsyncadd %s2249, %s2258
          %s2260 = smul.addr %s2256, 16
          %s2261 = smul.addr %s2260, 128
          %s2262 = scalar_lea.hbm %s4, %s2261
          %s2263 = sshll.u32 %s2252, 4
          %s2264 = int_to_ptr.vmem [resolvable:$true] %s2263
          %2269 = dma.vmem_to_hbm [thread:$0]  %s2264, 4096, %s2262, %s2249, 256, 256, 16
        $region44: #{tpu_custom_call.1} parent=35 // pred_fallthru
          _
      $region36: #{tpu_custom_call.1} parent=5 // pred_fallthru
        _
      %p2270 = scmp.le.s32.totalorder 2, %s17
      // Predicated region
      $region45: #{tpu_custom_call.1} parent=5 // pred_check
        %p2271 = pneg %p2270
      $region46: #{tpu_custom_call.1} parent=5 // pred_check_branch
        %2273 = sbr.rel (%p2271) target = $region48
      $region47: #{tpu_custom_call.1} parent=5 // pred_region
        %s2274 = ssub.s32 %s17, 2
        // Predicated region
        $region49: #{tpu_custom_call.1} parent=47 // pred_check
          %p2275 = pneg %p135
        $region50: #{tpu_custom_call.1} parent=47 // pred_check_branch
          %2277 = sbr.rel (%p2275) target = $region52
        $region51: #{tpu_custom_call.1} parent=47 // pred_region
          %s2278 = sand.u32 %s120, 1
          %s2279 = scalar_lea.sflag [#allocation5], %s2278
          %s2280 = sand.u32 %s120, 1
          %s2281 = smul.addr %s2280, 256
          %s2282 = scalar_lea.vmem [#allocation6], %s2281
          %2283 = dma.done %s2279, 4096
        $region52: #{tpu_custom_call.1} parent=47 // pred_fallthru
          _
      $region48: #{tpu_custom_call.1} parent=5 // pred_fallthru
        _
    $region6: #{tpu_custom_call.1} parent=1 // loop_footer
      %s21 = sadd.s32 1, %s17
    $region7: #{tpu_custom_call.1} parent=1 // loop_footer_branch
      %16 = sbr.rel target = $region3
    $region8: #{tpu_custom_call.1} parent=1 // loop_exit
      _
    %2284 = vsyncpa [#allocation4], 1
    %s2285 = scalar_lea.sflag [#allocation4], 1
    %2286 = vsyncpa %s2285, 1
    %2287 = vsyncpa [#allocation5], 1
    %s2288 = scalar_lea.sflag [#allocation5], 1
    %2289 = vsyncpa %s2288, 1

</llo_original>
